<compile_context>
chip_gen: v7x
topology: tpu7x:2x2x1
jax: 0.10.0
libtpu: 0.0.40
codegen_flags: <defaults>
</compile_context>

<pallas_src>
import jax
import jax.numpy as jnp
from jax.experimental import pallas as pl
from jax.experimental.pallas import tpu as pltpu


def _pick_row_block(ho, k, wp, vreg_budget=56):
    """Largest divisor RB of `ho` whose per-chunk live-vreg estimate fits.

    Estimate (f32 worst case): chunk (RB+K-1 rows) + one shifted copy of it +
    f32 accumulator (RB rows), each row ~ceil(wp/8) vregs, plus ~12 vregs for
    hoisted weights/bias and transient products.
    """
    vpr = -(-wp // 8)          # vregs per (row, C=lane) slab
    best = 1
    for rb in range(1, ho + 1):
        if ho % rb:
            continue
        est = 2 * (rb + k - 1) * vpr + rb * vpr + 12
        if est <= vreg_budget:
            best = rb
    return best


def _make_dwconv_kernel(H, W, C, K, pad, RB):
    Hp, Wp = H + 2 * pad, W + 2 * pad
    Ho, Wo = Hp - K + 1, Wp - K + 1
    n_chunks = Ho // RB
    CH = RB + K - 1  # input rows needed per output row chunk

    def kernel(x_ref, w_ref, b_ref, o_ref, xpad):
        # x_ref: (1, H, W, C) unpadded input block
        # w_ref: (K*K, C)     depthwise weights, tap index = kh*K + kw
        # b_ref: (1, C)       bias
        # o_ref: (1, Ho, Wo, C)
        # xpad : (Hp, Wp, C)  VMEM scratch holding the zero-padded block
        dt = x_ref.dtype

        # ---- fused zero padding: zero only the halo strips, copy interior ----
        # Interior is fully overwritten every step; halo zero is per-step (not
        # once-only) so it stays correct if the parallel batch axis is split
        # across TensorCores (each core has its own uninitialized scratch).
        if pad > 0:
            xpad[0:pad, :, :] = jnp.zeros((pad, Wp, C), dt)
            xpad[pad + H:Hp, :, :] = jnp.zeros((pad, Wp, C), dt)
            xpad[pad:pad + H, 0:pad, :] = jnp.zeros((H, pad, C), dt)
            xpad[pad:pad + H, pad + W:Wp, :] = jnp.zeros((H, pad, C), dt)
        xpad[pad:pad + H, pad:pad + W, :] = x_ref[0]

        # ---- hoisted tap-weight / bias broadcasts (not CSE'd if left inline) --
        w_act = w_ref[...].astype(dt)                          # multiply in act dtype
        wb = [w_act[t][None, None, :] for t in range(K * K)]   # (1, 1, C) each
        b_f32 = b_ref[0].astype(jnp.float32)[None, None, :]    # (1, 1, C)

        def chunk_body(rb_i, carry):
            h0 = rb_i * RB
            # One aligned full-width load per chunk; kw taps come from
            # in-register sublane shifts instead of unaligned VMEM reloads.
            chunk = xpad[pl.ds(h0, CH), :, :]                  # (CH, Wp, C)
            acc = None
            for kw in range(K):
                shifted = chunk[:, kw:kw + Wo, :]              # in-register shift
                for kh in range(K):
                    # bf16 multiply / f32 accumulate on v6e-v7x; pure f32 on f32 inputs.
                    t = (shifted[kh:kh + RB] * wb[kh * K + kw]).astype(jnp.float32)
                    acc = t if acc is None else acc + t
            # f32 bias add fused with the cast + lane-dense per-chunk store
            o_ref[0, pl.ds(h0, RB), :, :] = (acc + b_f32).astype(o_ref.dtype)
            return carry

        jax.lax.fori_loop(0, n_chunks, chunk_body, 0, unroll=True)

    return kernel


def dwconv(x_nchw, weight_oihw, bias, kernel_size=3, padding=2):
    """Matches nn.Conv2d(C, C, K, stride=1, padding=p, bias=True, groups=C)."""
    N, C, H, W = x_nchw.shape
    K = kernel_size
    Hp, Wp = H + 2 * padding, W + 2 * padding
    Ho, Wo = Hp - K + 1, Wp - K + 1
    RB = _pick_row_block(Ho, K, Wp)

    # NCHW -> NHWC (module boundary is NCHW; keep NHWC persistent in-model to avoid this)
    x = jnp.transpose(x_nchw, (0, 2, 3, 1))
    # (C, 1, K, K) -> (K*K, C), tap index = kh*K + kw
    w = jnp.transpose(weight_oihw[:, 0, :, :].reshape(C, K * K), (1, 0))
    b = bias.reshape(1, C)

    kernel = _make_dwconv_kernel(H, W, C, K, padding, RB)

    out_nhwc = pl.pallas_call(
        kernel,
        out_shape=jax.ShapeDtypeStruct((N, Ho, Wo, C), x_nchw.dtype),
        grid_spec=pltpu.PrefetchScalarGridSpec(
            num_scalar_prefetch=0,
            grid=(N,),
            in_specs=[
                pl.BlockSpec((1, H, W, C), lambda n: (n, 0, 0, 0)),
                pl.BlockSpec((K * K, C), lambda n: (0, 0)),
                pl.BlockSpec((1, C), lambda n: (0, 0)),
            ],
            out_specs=pl.BlockSpec((1, Ho, Wo, C), lambda n: (n, 0, 0, 0)),
            scratch_shapes=[pltpu.VMEM((Hp, Wp, C), x_nchw.dtype)],
        ),
        compiler_params=pltpu.CompilerParams(
            dimension_semantics=("parallel",)),  # batch axis -> both TCs on v7x
    )(x, w, b)

    # NHWC -> NCHW to match the PyTorch module's output convention
    return jnp.transpose(out_nhwc, (0, 3, 1, 2))


def _reference(x_nchw, weight_oihw, bias, padding=2):
    C = x_nchw.shape[1]
    out = jax.lax.conv_general_dilated(
        x_nchw, weight_oihw,
        window_strides=(1, 1),
        padding=[(padding, padding), (padding, padding)],
        feature_group_count=C,
        dimension_numbers=("NCHW", "OIHW", "NCHW"),
    )
    return out + bias[None, :, None, None]


if __name__ == "__main__":
    N, C, H, W = 2, 128, 16, 16      # embed_dim=C (small, lane-aligned stand-in for 768)
    K, PAD = 3, 2

    key = jax.random.PRNGKey(0)
    kx, kw_, kb = jax.random.split(key, 3)

    x = jax.random.normal(kx, (N, C, H, W), dtype=jnp.float32)
    # nn.Conv2d(groups=C) depthwise weight shape: (C, 1, K, K), plus bias (C,)
    weight = jax.random.normal(kw_, (C, 1, K, K), dtype=jnp.float32) * 0.1
    bias = jax.random.normal(kb, (C,), dtype=jnp.float32) * 0.1

    out = dwconv(x, weight, bias, kernel_size=K, padding=PAD)
    out = jax.block_until_ready(out)

    ref = _reference(x, weight, bias, padding=PAD)
    assert out.shape == (N, C, H + 2, W + 2), out.shape
    assert jnp.allclose(out, ref, atol=1e-4, rtol=1e-4), "mismatch vs lax reference"

    print("KERNEL_OK")
</pallas_src>

<mosaic_0001>
module attributes {stable_mosaic.version = 11 : i64} {
  func.func @kernel(%arg0: i32, %arg1: memref<1x16x16x128xf32, #tpu.memory_space<vmem>>, %arg2: memref<9x128xf32, #tpu.memory_space<vmem>>, %arg3: memref<1x128xf32, #tpu.memory_space<vmem>>, %arg4: memref<1x18x18x128xf32, #tpu.memory_space<vmem>>, %arg5: memref<20x20x128xf32, #tpu.memory_space<vmem>>) attributes {dimension_semantics = [#tpu.dimension_semantics<parallel>], iteration_bounds = array<i64: 2>, scalar_prefetch = 0 : i64, scratch_operands = 1 : i64, tpu.core_type = #tpu.core_type<tc>, window_params = [{transform_indices = @transform_0, window_bounds = array<i64: 1, 16, 16, 128>}, {pipeline_mode = #tpu.pipeline_mode<synchronous>, transform_indices = @transform_1, window_bounds = array<i64: 9, 128>}, {pipeline_mode = #tpu.pipeline_mode<synchronous>, transform_indices = @transform_2, window_bounds = array<i64: 1, 128>}, {transform_indices = @transform_3, window_bounds = array<i64: 1, 18, 18, 128>}]} {
    %cst = arith.constant 0.000000e+00 : f32
    %0 = vector.broadcast %cst : f32 to vector<2x20x128xf32>
    %c0 = arith.constant 0 : index
    %c0_0 = arith.constant 0 : index
    %c0_1 = arith.constant 0 : index
    %1 = vector.load %arg5[%c0, %c0_0, %c0_1] : memref<20x20x128xf32, #tpu.memory_space<vmem>>, vector<2x20x128xf32>
    tpu.vector_store %arg5[%c0, %c0_0, %c0_1], %0 {strides = array<i32>} : memref<20x20x128xf32, #tpu.memory_space<vmem>>, vector<2x20x128xf32>,
    %cst_2 = arith.constant 0.000000e+00 : f32
    %2 = vector.broadcast %cst_2 : f32 to vector<2x20x128xf32>
    %c18 = arith.constant 18 : index
    %c0_3 = arith.constant 0 : index
    %c0_4 = arith.constant 0 : index
    %3 = vector.load %arg5[%c18, %c0_3, %c0_4] : memref<20x20x128xf32, #tpu.memory_space<vmem>>, vector<2x20x128xf32>
    tpu.vector_store %arg5[%c18, %c0_3, %c0_4], %2 {strides = array<i32>} : memref<20x20x128xf32, #tpu.memory_space<vmem>>, vector<2x20x128xf32>,
    %cst_5 = arith.constant 0.000000e+00 : f32
    %4 = vector.broadcast %cst_5 : f32 to vector<16x2x128xf32>
    %c2 = arith.constant 2 : index
    %c0_6 = arith.constant 0 : index
    %c0_7 = arith.constant 0 : index
    %5 = vector.load %arg5[%c2, %c0_6, %c0_7] : memref<20x20x128xf32, #tpu.memory_space<vmem>>, vector<16x2x128xf32>
    tpu.vector_store %arg5[%c2, %c0_6, %c0_7], %4 {strides = array<i32>} : memref<20x20x128xf32, #tpu.memory_space<vmem>>, vector<16x2x128xf32>,
    %cst_8 = arith.constant 0.000000e+00 : f32
    %6 = vector.broadcast %cst_8 : f32 to vector<16x2x128xf32>
    %c2_9 = arith.constant 2 : index
    %c18_10 = arith.constant 18 : index
    %c0_11 = arith.constant 0 : index
    %7 = vector.load %arg5[%c2_9, %c18_10, %c0_11] : memref<20x20x128xf32, #tpu.memory_space<vmem>>, vector<16x2x128xf32>
    tpu.vector_store %arg5[%c2_9, %c18_10, %c0_11], %6 {strides = array<i32>} : memref<20x20x128xf32, #tpu.memory_space<vmem>>, vector<16x2x128xf32>,
    %c0_12 = arith.constant 0 : index
    %c0_13 = arith.constant 0 : index
    %c0_14 = arith.constant 0 : index
    %c0_15 = arith.constant 0 : index
    %8 = vector.load %arg1[%c0_12, %c0_13, %c0_14, %c0_15] : memref<1x16x16x128xf32, #tpu.memory_space<vmem>>, vector<1x16x16x128xf32>
    %9 = vector.shape_cast %8 : vector<1x16x16x128xf32> to vector<16x16x128xf32>
    %c2_16 = arith.constant 2 : index
    %c2_17 = arith.constant 2 : index
    %c0_18 = arith.constant 0 : index
    %10 = vector.load %arg5[%c2_16, %c2_17, %c0_18] : memref<20x20x128xf32, #tpu.memory_space<vmem>>, vector<16x16x128xf32>
    tpu.vector_store %arg5[%c2_16, %c2_17, %c0_18], %9 {strides = array<i32>} : memref<20x20x128xf32, #tpu.memory_space<vmem>>, vector<16x16x128xf32>,
    %c0_19 = arith.constant 0 : index
    %c0_20 = arith.constant 0 : index
    %11 = vector.load %arg2[%c0_19, %c0_20] : memref<9x128xf32, #tpu.memory_space<vmem>>, vector<9x128xf32>
    %12 = vector.extract_strided_slice %11 {offsets = [0, 0], sizes = [1, 128], strides = [1, 1]} : vector<9x128xf32> to vector<1x128xf32>
    %13 = vector.shape_cast %12 : vector<1x128xf32> to vector<128xf32>
    %14 = vector.shape_cast %13 : vector<128xf32> to vector<1x1x128xf32>
    %15 = vector.extract_strided_slice %11 {offsets = [1, 0], sizes = [1, 128], strides = [1, 1]} : vector<9x128xf32> to vector<1x128xf32>
    %16 = vector.shape_cast %15 : vector<1x128xf32> to vector<128xf32>
    %17 = vector.shape_cast %16 : vector<128xf32> to vector<1x1x128xf32>
    %18 = vector.extract_strided_slice %11 {offsets = [2, 0], sizes = [1, 128], strides = [1, 1]} : vector<9x128xf32> to vector<1x128xf32>
    %19 = vector.shape_cast %18 : vector<1x128xf32> to vector<128xf32>
    %20 = vector.shape_cast %19 : vector<128xf32> to vector<1x1x128xf32>
    %21 = vector.extract_strided_slice %11 {offsets = [3, 0], sizes = [1, 128], strides = [1, 1]} : vector<9x128xf32> to vector<1x128xf32>
    %22 = vector.shape_cast %21 : vector<1x128xf32> to vector<128xf32>
    %23 = vector.shape_cast %22 : vector<128xf32> to vector<1x1x128xf32>
    %24 = vector.extract_strided_slice %11 {offsets = [4, 0], sizes = [1, 128], strides = [1, 1]} : vector<9x128xf32> to vector<1x128xf32>
    %25 = vector.shape_cast %24 : vector<1x128xf32> to vector<128xf32>
    %26 = vector.shape_cast %25 : vector<128xf32> to vector<1x1x128xf32>
    %27 = vector.extract_strided_slice %11 {offsets = [5, 0], sizes = [1, 128], strides = [1, 1]} : vector<9x128xf32> to vector<1x128xf32>
    %28 = vector.shape_cast %27 : vector<1x128xf32> to vector<128xf32>
    %29 = vector.shape_cast %28 : vector<128xf32> to vector<1x1x128xf32>
    %30 = vector.extract_strided_slice %11 {offsets = [6, 0], sizes = [1, 128], strides = [1, 1]} : vector<9x128xf32> to vector<1x128xf32>
    %31 = vector.shape_cast %30 : vector<1x128xf32> to vector<128xf32>
    %32 = vector.shape_cast %31 : vector<128xf32> to vector<1x1x128xf32>
    %33 = vector.extract_strided_slice %11 {offsets = [7, 0], sizes = [1, 128], strides = [1, 1]} : vector<9x128xf32> to vector<1x128xf32>
    %34 = vector.shape_cast %33 : vector<1x128xf32> to vector<128xf32>
    %35 = vector.shape_cast %34 : vector<128xf32> to vector<1x1x128xf32>
    %36 = vector.extract_strided_slice %11 {offsets = [8, 0], sizes = [1, 128], strides = [1, 1]} : vector<9x128xf32> to vector<1x128xf32>
    %37 = vector.shape_cast %36 : vector<1x128xf32> to vector<128xf32>
    %38 = vector.shape_cast %37 : vector<128xf32> to vector<1x1x128xf32>
    %c0_21 = arith.constant 0 : index
    %c0_22 = arith.constant 0 : index
    %39 = vector.load %arg3[%c0_21, %c0_22] : memref<1x128xf32, #tpu.memory_space<vmem>>, vector<1x128xf32>
    %40 = vector.shape_cast %39 : vector<1x128xf32> to vector<128xf32>
    %41 = vector.shape_cast %40 : vector<128xf32> to vector<1x1x128xf32>
    %c0_i32 = arith.constant 0 : i32
    %c3_i32 = arith.constant 3 : i32
    %42 = arith.muli %c0_i32, %c3_i32 : i32
    %43 = arith.index_cast %42 : i32 to index
    %c0_23 = arith.constant 0 : index
    %c0_24 = arith.constant 0 : index
    %44 = vector.load %arg5[%43, %c0_23, %c0_24] : memref<20x20x128xf32, #tpu.memory_space<vmem>>, vector<5x20x128xf32>
    %45 = vector.extract_strided_slice %44 {offsets = [0, 0, 0], sizes = [5, 18, 128], strides = [1, 1, 1]} : vector<5x20x128xf32> to vector<5x18x128xf32>
    %46 = vector.extract_strided_slice %45 {offsets = [0, 0, 0], sizes = [3, 18, 128], strides = [1, 1, 1]} : vector<5x18x128xf32> to vector<3x18x128xf32>
    %47 = vector.broadcast %14 : vector<1x1x128xf32> to vector<3x18x128xf32>
    %48 = arith.mulf %46, %47 : vector<3x18x128xf32>
    %49 = vector.extract_strided_slice %45 {offsets = [1, 0, 0], sizes = [3, 18, 128], strides = [1, 1, 1]} : vector<5x18x128xf32> to vector<3x18x128xf32>
    %50 = vector.broadcast %23 : vector<1x1x128xf32> to vector<3x18x128xf32>
    %51 = arith.mulf %49, %50 : vector<3x18x128xf32>
    %52 = arith.addf %48, %51 : vector<3x18x128xf32>
    %53 = vector.extract_strided_slice %45 {offsets = [2, 0, 0], sizes = [3, 18, 128], strides = [1, 1, 1]} : vector<5x18x128xf32> to vector<3x18x128xf32>
    %54 = vector.broadcast %32 : vector<1x1x128xf32> to vector<3x18x128xf32>
    %55 = arith.mulf %53, %54 : vector<3x18x128xf32>
    %56 = arith.addf %52, %55 : vector<3x18x128xf32>
    %57 = vector.extract_strided_slice %44 {offsets = [0, 1, 0], sizes = [5, 18, 128], strides = [1, 1, 1]} : vector<5x20x128xf32> to vector<5x18x128xf32>
    %58 = vector.extract_strided_slice %57 {offsets = [0, 0, 0], sizes = [3, 18, 128], strides = [1, 1, 1]} : vector<5x18x128xf32> to vector<3x18x128xf32>
    %59 = vector.broadcast %17 : vector<1x1x128xf32> to vector<3x18x128xf32>
    %60 = arith.mulf %58, %59 : vector<3x18x128xf32>
    %61 = arith.addf %56, %60 : vector<3x18x128xf32>
    %62 = vector.extract_strided_slice %57 {offsets = [1, 0, 0], sizes = [3, 18, 128], strides = [1, 1, 1]} : vector<5x18x128xf32> to vector<3x18x128xf32>
    %63 = vector.broadcast %26 : vector<1x1x128xf32> to vector<3x18x128xf32>
    %64 = arith.mulf %62, %63 : vector<3x18x128xf32>
    %65 = arith.addf %61, %64 : vector<3x18x128xf32>
    %66 = vector.extract_strided_slice %57 {offsets = [2, 0, 0], sizes = [3, 18, 128], strides = [1, 1, 1]} : vector<5x18x128xf32> to vector<3x18x128xf32>
    %67 = vector.broadcast %35 : vector<1x1x128xf32> to vector<3x18x128xf32>
    %68 = arith.mulf %66, %67 : vector<3x18x128xf32>
    %69 = arith.addf %65, %68 : vector<3x18x128xf32>
    %70 = vector.extract_strided_slice %44 {offsets = [0, 2, 0], sizes = [5, 18, 128], strides = [1, 1, 1]} : vector<5x20x128xf32> to vector<5x18x128xf32>
    %71 = vector.extract_strided_slice %70 {offsets = [0, 0, 0], sizes = [3, 18, 128], strides = [1, 1, 1]} : vector<5x18x128xf32> to vector<3x18x128xf32>
    %72 = vector.broadcast %20 : vector<1x1x128xf32> to vector<3x18x128xf32>
    %73 = arith.mulf %71, %72 : vector<3x18x128xf32>
    %74 = arith.addf %69, %73 : vector<3x18x128xf32>
    %75 = vector.extract_strided_slice %70 {offsets = [1, 0, 0], sizes = [3, 18, 128], strides = [1, 1, 1]} : vector<5x18x128xf32> to vector<3x18x128xf32>
    %76 = vector.broadcast %29 : vector<1x1x128xf32> to vector<3x18x128xf32>
    %77 = arith.mulf %75, %76 : vector<3x18x128xf32>
    %78 = arith.addf %74, %77 : vector<3x18x128xf32>
    %79 = vector.extract_strided_slice %70 {offsets = [2, 0, 0], sizes = [3, 18, 128], strides = [1, 1, 1]} : vector<5x18x128xf32> to vector<3x18x128xf32>
    %80 = vector.broadcast %38 : vector<1x1x128xf32> to vector<3x18x128xf32>
    %81 = arith.mulf %79, %80 : vector<3x18x128xf32>
    %82 = arith.addf %78, %81 : vector<3x18x128xf32>
    %83 = vector.broadcast %41 : vector<1x1x128xf32> to vector<3x18x128xf32>
    %84 = arith.addf %82, %83 : vector<3x18x128xf32>
    %c0_25 = arith.constant 0 : index
    %85 = arith.index_cast %42 : i32 to index
    %c0_26 = arith.constant 0 : index
    %c0_27 = arith.constant 0 : index
    %86 = vector.load %arg4[%c0_25, %85, %c0_26, %c0_27] : memref<1x18x18x128xf32, #tpu.memory_space<vmem>>, vector<1x3x18x128xf32>
    %87 = vector.shape_cast %86 : vector<1x3x18x128xf32> to vector<3x18x128xf32>
    %88 = vector.shape_cast %84 : vector<3x18x128xf32> to vector<1x3x18x128xf32>
    tpu.vector_store %arg4[%c0_25, %85, %c0_26, %c0_27], %88 {strides = array<i32>} : memref<1x18x18x128xf32, #tpu.memory_space<vmem>>, vector<1x3x18x128xf32>,
    %c1_i32 = arith.constant 1 : i32
    %c3_i32_28 = arith.constant 3 : i32
    %89 = arith.muli %c1_i32, %c3_i32_28 : i32
    %90 = arith.index_cast %89 : i32 to index
    %c0_29 = arith.constant 0 : index
    %c0_30 = arith.constant 0 : index
    %91 = vector.load %arg5[%90, %c0_29, %c0_30] : memref<20x20x128xf32, #tpu.memory_space<vmem>>, vector<5x20x128xf32>
    %92 = vector.extract_strided_slice %91 {offsets = [0, 0, 0], sizes = [5, 18, 128], strides = [1, 1, 1]} : vector<5x20x128xf32> to vector<5x18x128xf32>
    %93 = vector.extract_strided_slice %92 {offsets = [0, 0, 0], sizes = [3, 18, 128], strides = [1, 1, 1]} : vector<5x18x128xf32> to vector<3x18x128xf32>
    %94 = vector.broadcast %14 : vector<1x1x128xf32> to vector<3x18x128xf32>
    %95 = arith.mulf %93, %94 : vector<3x18x128xf32>
    %96 = vector.extract_strided_slice %92 {offsets = [1, 0, 0], sizes = [3, 18, 128], strides = [1, 1, 1]} : vector<5x18x128xf32> to vector<3x18x128xf32>
    %97 = vector.broadcast %23 : vector<1x1x128xf32> to vector<3x18x128xf32>
    %98 = arith.mulf %96, %97 : vector<3x18x128xf32>
    %99 = arith.addf %95, %98 : vector<3x18x128xf32>
    %100 = vector.extract_strided_slice %92 {offsets = [2, 0, 0], sizes = [3, 18, 128], strides = [1, 1, 1]} : vector<5x18x128xf32> to vector<3x18x128xf32>
    %101 = vector.broadcast %32 : vector<1x1x128xf32> to vector<3x18x128xf32>
    %102 = arith.mulf %100, %101 : vector<3x18x128xf32>
    %103 = arith.addf %99, %102 : vector<3x18x128xf32>
    %104 = vector.extract_strided_slice %91 {offsets = [0, 1, 0], sizes = [5, 18, 128], strides = [1, 1, 1]} : vector<5x20x128xf32> to vector<5x18x128xf32>
    %105 = vector.extract_strided_slice %104 {offsets = [0, 0, 0], sizes = [3, 18, 128], strides = [1, 1, 1]} : vector<5x18x128xf32> to vector<3x18x128xf32>
    %106 = vector.broadcast %17 : vector<1x1x128xf32> to vector<3x18x128xf32>
    %107 = arith.mulf %105, %106 : vector<3x18x128xf32>
    %108 = arith.addf %103, %107 : vector<3x18x128xf32>
    %109 = vector.extract_strided_slice %104 {offsets = [1, 0, 0], sizes = [3, 18, 128], strides = [1, 1, 1]} : vector<5x18x128xf32> to vector<3x18x128xf32>
    %110 = vector.broadcast %26 : vector<1x1x128xf32> to vector<3x18x128xf32>
    %111 = arith.mulf %109, %110 : vector<3x18x128xf32>
    %112 = arith.addf %108, %111 : vector<3x18x128xf32>
    %113 = vector.extract_strided_slice %104 {offsets = [2, 0, 0], sizes = [3, 18, 128], strides = [1, 1, 1]} : vector<5x18x128xf32> to vector<3x18x128xf32>
    %114 = vector.broadcast %35 : vector<1x1x128xf32> to vector<3x18x128xf32>
    %115 = arith.mulf %113, %114 : vector<3x18x128xf32>
    %116 = arith.addf %112, %115 : vector<3x18x128xf32>
    %117 = vector.extract_strided_slice %91 {offsets = [0, 2, 0], sizes = [5, 18, 128], strides = [1, 1, 1]} : vector<5x20x128xf32> to vector<5x18x128xf32>
    %118 = vector.extract_strided_slice %117 {offsets = [0, 0, 0], sizes = [3, 18, 128], strides = [1, 1, 1]} : vector<5x18x128xf32> to vector<3x18x128xf32>
    %119 = vector.broadcast %20 : vector<1x1x128xf32> to vector<3x18x128xf32>
    %120 = arith.mulf %118, %119 : vector<3x18x128xf32>
    %121 = arith.addf %116, %120 : vector<3x18x128xf32>
    %122 = vector.extract_strided_slice %117 {offsets = [1, 0, 0], sizes = [3, 18, 128], strides = [1, 1, 1]} : vector<5x18x128xf32> to vector<3x18x128xf32>
    %123 = vector.broadcast %29 : vector<1x1x128xf32> to vector<3x18x128xf32>
    %124 = arith.mulf %122, %123 : vector<3x18x128xf32>
    %125 = arith.addf %121, %124 : vector<3x18x128xf32>
    %126 = vector.extract_strided_slice %117 {offsets = [2, 0, 0], sizes = [3, 18, 128], strides = [1, 1, 1]} : vector<5x18x128xf32> to vector<3x18x128xf32>
    %127 = vector.broadcast %38 : vector<1x1x128xf32> to vector<3x18x128xf32>
    %128 = arith.mulf %126, %127 : vector<3x18x128xf32>
    %129 = arith.addf %125, %128 : vector<3x18x128xf32>
    %130 = vector.broadcast %41 : vector<1x1x128xf32> to vector<3x18x128xf32>
    %131 = arith.addf %129, %130 : vector<3x18x128xf32>
    %c0_31 = arith.constant 0 : index
    %132 = arith.index_cast %89 : i32 to index
    %c0_32 = arith.constant 0 : index
    %c0_33 = arith.constant 0 : index
    %133 = vector.load %arg4[%c0_31, %132, %c0_32, %c0_33] : memref<1x18x18x128xf32, #tpu.memory_space<vmem>>, vector<1x3x18x128xf32>
    %134 = vector.shape_cast %133 : vector<1x3x18x128xf32> to vector<3x18x128xf32>
    %135 = vector.shape_cast %131 : vector<3x18x128xf32> to vector<1x3x18x128xf32>
    tpu.vector_store %arg4[%c0_31, %132, %c0_32, %c0_33], %135 {strides = array<i32>} : memref<1x18x18x128xf32, #tpu.memory_space<vmem>>, vector<1x3x18x128xf32>,
    %c2_i32 = arith.constant 2 : i32
    %c3_i32_34 = arith.constant 3 : i32
    %136 = arith.muli %c2_i32, %c3_i32_34 : i32
    %137 = arith.index_cast %136 : i32 to index
    %c0_35 = arith.constant 0 : index
    %c0_36 = arith.constant 0 : index
    %138 = vector.load %arg5[%137, %c0_35, %c0_36] : memref<20x20x128xf32, #tpu.memory_space<vmem>>, vector<5x20x128xf32>
    %139 = vector.extract_strided_slice %138 {offsets = [0, 0, 0], sizes = [5, 18, 128], strides = [1, 1, 1]} : vector<5x20x128xf32> to vector<5x18x128xf32>
    %140 = vector.extract_strided_slice %139 {offsets = [0, 0, 0], sizes = [3, 18, 128], strides = [1, 1, 1]} : vector<5x18x128xf32> to vector<3x18x128xf32>
    %141 = vector.broadcast %14 : vector<1x1x128xf32> to vector<3x18x128xf32>
    %142 = arith.mulf %140, %141 : vector<3x18x128xf32>
    %143 = vector.extract_strided_slice %139 {offsets = [1, 0, 0], sizes = [3, 18, 128], strides = [1, 1, 1]} : vector<5x18x128xf32> to vector<3x18x128xf32>
    %144 = vector.broadcast %23 : vector<1x1x128xf32> to vector<3x18x128xf32>
    %145 = arith.mulf %143, %144 : vector<3x18x128xf32>
    %146 = arith.addf %142, %145 : vector<3x18x128xf32>
    %147 = vector.extract_strided_slice %139 {offsets = [2, 0, 0], sizes = [3, 18, 128], strides = [1, 1, 1]} : vector<5x18x128xf32> to vector<3x18x128xf32>
    %148 = vector.broadcast %32 : vector<1x1x128xf32> to vector<3x18x128xf32>
    %149 = arith.mulf %147, %148 : vector<3x18x128xf32>
    %150 = arith.addf %146, %149 : vector<3x18x128xf32>
    %151 = vector.extract_strided_slice %138 {offsets = [0, 1, 0], sizes = [5, 18, 128], strides = [1, 1, 1]} : vector<5x20x128xf32> to vector<5x18x128xf32>
    %152 = vector.extract_strided_slice %151 {offsets = [0, 0, 0], sizes = [3, 18, 128], strides = [1, 1, 1]} : vector<5x18x128xf32> to vector<3x18x128xf32>
    %153 = vector.broadcast %17 : vector<1x1x128xf32> to vector<3x18x128xf32>
    %154 = arith.mulf %152, %153 : vector<3x18x128xf32>
    %155 = arith.addf %150, %154 : vector<3x18x128xf32>
    %156 = vector.extract_strided_slice %151 {offsets = [1, 0, 0], sizes = [3, 18, 128], strides = [1, 1, 1]} : vector<5x18x128xf32> to vector<3x18x128xf32>
    %157 = vector.broadcast %26 : vector<1x1x128xf32> to vector<3x18x128xf32>
    %158 = arith.mulf %156, %157 : vector<3x18x128xf32>
    %159 = arith.addf %155, %158 : vector<3x18x128xf32>
    %160 = vector.extract_strided_slice %151 {offsets = [2, 0, 0], sizes = [3, 18, 128], strides = [1, 1, 1]} : vector<5x18x128xf32> to vector<3x18x128xf32>
    %161 = vector.broadcast %35 : vector<1x1x128xf32> to vector<3x18x128xf32>
    %162 = arith.mulf %160, %161 : vector<3x18x128xf32>
    %163 = arith.addf %159, %162 : vector<3x18x128xf32>
    %164 = vector.extract_strided_slice %138 {offsets = [0, 2, 0], sizes = [5, 18, 128], strides = [1, 1, 1]} : vector<5x20x128xf32> to vector<5x18x128xf32>
    %165 = vector.extract_strided_slice %164 {offsets = [0, 0, 0], sizes = [3, 18, 128], strides = [1, 1, 1]} : vector<5x18x128xf32> to vector<3x18x128xf32>
    %166 = vector.broadcast %20 : vector<1x1x128xf32> to vector<3x18x128xf32>
    %167 = arith.mulf %165, %166 : vector<3x18x128xf32>
    %168 = arith.addf %163, %167 : vector<3x18x128xf32>
    %169 = vector.extract_strided_slice %164 {offsets = [1, 0, 0], sizes = [3, 18, 128], strides = [1, 1, 1]} : vector<5x18x128xf32> to vector<3x18x128xf32>
    %170 = vector.broadcast %29 : vector<1x1x128xf32> to vector<3x18x128xf32>
    %171 = arith.mulf %169, %170 : vector<3x18x128xf32>
    %172 = arith.addf %168, %171 : vector<3x18x128xf32>
    %173 = vector.extract_strided_slice %164 {offsets = [2, 0, 0], sizes = [3, 18, 128], strides = [1, 1, 1]} : vector<5x18x128xf32> to vector<3x18x128xf32>
    %174 = vector.broadcast %38 : vector<1x1x128xf32> to vector<3x18x128xf32>
    %175 = arith.mulf %173, %174 : vector<3x18x128xf32>
    %176 = arith.addf %172, %175 : vector<3x18x128xf32>
    %177 = vector.broadcast %41 : vector<1x1x128xf32> to vector<3x18x128xf32>
    %178 = arith.addf %176, %177 : vector<3x18x128xf32>
    %c0_37 = arith.constant 0 : index
    %179 = arith.index_cast %136 : i32 to index
    %c0_38 = arith.constant 0 : index
    %c0_39 = arith.constant 0 : index
    %180 = vector.load %arg4[%c0_37, %179, %c0_38, %c0_39] : memref<1x18x18x128xf32, #tpu.memory_space<vmem>>, vector<1x3x18x128xf32>
    %181 = vector.shape_cast %180 : vector<1x3x18x128xf32> to vector<3x18x128xf32>
    %182 = vector.shape_cast %178 : vector<3x18x128xf32> to vector<1x3x18x128xf32>
    tpu.vector_store %arg4[%c0_37, %179, %c0_38, %c0_39], %182 {strides = array<i32>} : memref<1x18x18x128xf32, #tpu.memory_space<vmem>>, vector<1x3x18x128xf32>,
    %c3_i32_40 = arith.constant 3 : i32
    %c3_i32_41 = arith.constant 3 : i32
    %183 = arith.muli %c3_i32_40, %c3_i32_41 : i32
    %184 = arith.index_cast %183 : i32 to index
    %c0_42 = arith.constant 0 : index
    %c0_43 = arith.constant 0 : index
    %185 = vector.load %arg5[%184, %c0_42, %c0_43] : memref<20x20x128xf32, #tpu.memory_space<vmem>>, vector<5x20x128xf32>
    %186 = vector.extract_strided_slice %185 {offsets = [0, 0, 0], sizes = [5, 18, 128], strides = [1, 1, 1]} : vector<5x20x128xf32> to vector<5x18x128xf32>
    %187 = vector.extract_strided_slice %186 {offsets = [0, 0, 0], sizes = [3, 18, 128], strides = [1, 1, 1]} : vector<5x18x128xf32> to vector<3x18x128xf32>
    %188 = vector.broadcast %14 : vector<1x1x128xf32> to vector<3x18x128xf32>
    %189 = arith.mulf %187, %188 : vector<3x18x128xf32>
    %190 = vector.extract_strided_slice %186 {offsets = [1, 0, 0], sizes = [3, 18, 128], strides = [1, 1, 1]} : vector<5x18x128xf32> to vector<3x18x128xf32>
    %191 = vector.broadcast %23 : vector<1x1x128xf32> to vector<3x18x128xf32>
    %192 = arith.mulf %190, %191 : vector<3x18x128xf32>
    %193 = arith.addf %189, %192 : vector<3x18x128xf32>
    %194 = vector.extract_strided_slice %186 {offsets = [2, 0, 0], sizes = [3, 18, 128], strides = [1, 1, 1]} : vector<5x18x128xf32> to vector<3x18x128xf32>
    %195 = vector.broadcast %32 : vector<1x1x128xf32> to vector<3x18x128xf32>
    %196 = arith.mulf %194, %195 : vector<3x18x128xf32>
    %197 = arith.addf %193, %196 : vector<3x18x128xf32>
    %198 = vector.extract_strided_slice %185 {offsets = [0, 1, 0], sizes = [5, 18, 128], strides = [1, 1, 1]} : vector<5x20x128xf32> to vector<5x18x128xf32>
    %199 = vector.extract_strided_slice %198 {offsets = [0, 0, 0], sizes = [3, 18, 128], strides = [1, 1, 1]} : vector<5x18x128xf32> to vector<3x18x128xf32>
    %200 = vector.broadcast %17 : vector<1x1x128xf32> to vector<3x18x128xf32>
    %201 = arith.mulf %199, %200 : vector<3x18x128xf32>
    %202 = arith.addf %197, %201 : vector<3x18x128xf32>
    %203 = vector.extract_strided_slice %198 {offsets = [1, 0, 0], sizes = [3, 18, 128], strides = [1, 1, 1]} : vector<5x18x128xf32> to vector<3x18x128xf32>
    %204 = vector.broadcast %26 : vector<1x1x128xf32> to vector<3x18x128xf32>
    %205 = arith.mulf %203, %204 : vector<3x18x128xf32>
    %206 = arith.addf %202, %205 : vector<3x18x128xf32>
    %207 = vector.extract_strided_slice %198 {offsets = [2, 0, 0], sizes = [3, 18, 128], strides = [1, 1, 1]} : vector<5x18x128xf32> to vector<3x18x128xf32>
    %208 = vector.broadcast %35 : vector<1x1x128xf32> to vector<3x18x128xf32>
    %209 = arith.mulf %207, %208 : vector<3x18x128xf32>
    %210 = arith.addf %206, %209 : vector<3x18x128xf32>
    %211 = vector.extract_strided_slice %185 {offsets = [0, 2, 0], sizes = [5, 18, 128], strides = [1, 1, 1]} : vector<5x20x128xf32> to vector<5x18x128xf32>
    %212 = vector.extract_strided_slice %211 {offsets = [0, 0, 0], sizes = [3, 18, 128], strides = [1, 1, 1]} : vector<5x18x128xf32> to vector<3x18x128xf32>
    %213 = vector.broadcast %20 : vector<1x1x128xf32> to vector<3x18x128xf32>
    %214 = arith.mulf %212, %213 : vector<3x18x128xf32>
    %215 = arith.addf %210, %214 : vector<3x18x128xf32>
    %216 = vector.extract_strided_slice %211 {offsets = [1, 0, 0], sizes = [3, 18, 128], strides = [1, 1, 1]} : vector<5x18x128xf32> to vector<3x18x128xf32>
    %217 = vector.broadcast %29 : vector<1x1x128xf32> to vector<3x18x128xf32>
    %218 = arith.mulf %216, %217 : vector<3x18x128xf32>
    %219 = arith.addf %215, %218 : vector<3x18x128xf32>
    %220 = vector.extract_strided_slice %211 {offsets = [2, 0, 0], sizes = [3, 18, 128], strides = [1, 1, 1]} : vector<5x18x128xf32> to vector<3x18x128xf32>
    %221 = vector.broadcast %38 : vector<1x1x128xf32> to vector<3x18x128xf32>
    %222 = arith.mulf %220, %221 : vector<3x18x128xf32>
    %223 = arith.addf %219, %222 : vector<3x18x128xf32>
    %224 = vector.broadcast %41 : vector<1x1x128xf32> to vector<3x18x128xf32>
    %225 = arith.addf %223, %224 : vector<3x18x128xf32>
    %c0_44 = arith.constant 0 : index
    %226 = arith.index_cast %183 : i32 to index
    %c0_45 = arith.constant 0 : index
    %c0_46 = arith.constant 0 : index
    %227 = vector.load %arg4[%c0_44, %226, %c0_45, %c0_46] : memref<1x18x18x128xf32, #tpu.memory_space<vmem>>, vector<1x3x18x128xf32>
    %228 = vector.shape_cast %227 : vector<1x3x18x128xf32> to vector<3x18x128xf32>
    %229 = vector.shape_cast %225 : vector<3x18x128xf32> to vector<1x3x18x128xf32>
    tpu.vector_store %arg4[%c0_44, %226, %c0_45, %c0_46], %229 {strides = array<i32>} : memref<1x18x18x128xf32, #tpu.memory_space<vmem>>, vector<1x3x18x128xf32>,
    %c4_i32 = arith.constant 4 : i32
    %c3_i32_47 = arith.constant 3 : i32
    %230 = arith.muli %c4_i32, %c3_i32_47 : i32
    %231 = arith.index_cast %230 : i32 to index
    %c0_48 = arith.constant 0 : index
    %c0_49 = arith.constant 0 : index
    %232 = vector.load %arg5[%231, %c0_48, %c0_49] : memref<20x20x128xf32, #tpu.memory_space<vmem>>, vector<5x20x128xf32>
    %233 = vector.extract_strided_slice %232 {offsets = [0, 0, 0], sizes = [5, 18, 128], strides = [1, 1, 1]} : vector<5x20x128xf32> to vector<5x18x128xf32>
    %234 = vector.extract_strided_slice %233 {offsets = [0, 0, 0], sizes = [3, 18, 128], strides = [1, 1, 1]} : vector<5x18x128xf32> to vector<3x18x128xf32>
    %235 = vector.broadcast %14 : vector<1x1x128xf32> to vector<3x18x128xf32>
    %236 = arith.mulf %234, %235 : vector<3x18x128xf32>
    %237 = vector.extract_strided_slice %233 {offsets = [1, 0, 0], sizes = [3, 18, 128], strides = [1, 1, 1]} : vector<5x18x128xf32> to vector<3x18x128xf32>
    %238 = vector.broadcast %23 : vector<1x1x128xf32> to vector<3x18x128xf32>
    %239 = arith.mulf %237, %238 : vector<3x18x128xf32>
    %240 = arith.addf %236, %239 : vector<3x18x128xf32>
    %241 = vector.extract_strided_slice %233 {offsets = [2, 0, 0], sizes = [3, 18, 128], strides = [1, 1, 1]} : vector<5x18x128xf32> to vector<3x18x128xf32>
    %242 = vector.broadcast %32 : vector<1x1x128xf32> to vector<3x18x128xf32>
    %243 = arith.mulf %241, %242 : vector<3x18x128xf32>
    %244 = arith.addf %240, %243 : vector<3x18x128xf32>
    %245 = vector.extract_strided_slice %232 {offsets = [0, 1, 0], sizes = [5, 18, 128], strides = [1, 1, 1]} : vector<5x20x128xf32> to vector<5x18x128xf32>
    %246 = vector.extract_strided_slice %245 {offsets = [0, 0, 0], sizes = [3, 18, 128], strides = [1, 1, 1]} : vector<5x18x128xf32> to vector<3x18x128xf32>
    %247 = vector.broadcast %17 : vector<1x1x128xf32> to vector<3x18x128xf32>
    %248 = arith.mulf %246, %247 : vector<3x18x128xf32>
    %249 = arith.addf %244, %248 : vector<3x18x128xf32>
    %250 = vector.extract_strided_slice %245 {offsets = [1, 0, 0], sizes = [3, 18, 128], strides = [1, 1, 1]} : vector<5x18x128xf32> to vector<3x18x128xf32>
    %251 = vector.broadcast %26 : vector<1x1x128xf32> to vector<3x18x128xf32>
    %252 = arith.mulf %250, %251 : vector<3x18x128xf32>
    %253 = arith.addf %249, %252 : vector<3x18x128xf32>
    %254 = vector.extract_strided_slice %245 {offsets = [2, 0, 0], sizes = [3, 18, 128], strides = [1, 1, 1]} : vector<5x18x128xf32> to vector<3x18x128xf32>
    %255 = vector.broadcast %35 : vector<1x1x128xf32> to vector<3x18x128xf32>
    %256 = arith.mulf %254, %255 : vector<3x18x128xf32>
    %257 = arith.addf %253, %256 : vector<3x18x128xf32>
    %258 = vector.extract_strided_slice %232 {offsets = [0, 2, 0], sizes = [5, 18, 128], strides = [1, 1, 1]} : vector<5x20x128xf32> to vector<5x18x128xf32>
    %259 = vector.extract_strided_slice %258 {offsets = [0, 0, 0], sizes = [3, 18, 128], strides = [1, 1, 1]} : vector<5x18x128xf32> to vector<3x18x128xf32>
    %260 = vector.broadcast %20 : vector<1x1x128xf32> to vector<3x18x128xf32>
    %261 = arith.mulf %259, %260 : vector<3x18x128xf32>
    %262 = arith.addf %257, %261 : vector<3x18x128xf32>
    %263 = vector.extract_strided_slice %258 {offsets = [1, 0, 0], sizes = [3, 18, 128], strides = [1, 1, 1]} : vector<5x18x128xf32> to vector<3x18x128xf32>
    %264 = vector.broadcast %29 : vector<1x1x128xf32> to vector<3x18x128xf32>
    %265 = arith.mulf %263, %264 : vector<3x18x128xf32>
    %266 = arith.addf %262, %265 : vector<3x18x128xf32>
    %267 = vector.extract_strided_slice %258 {offsets = [2, 0, 0], sizes = [3, 18, 128], strides = [1, 1, 1]} : vector<5x18x128xf32> to vector<3x18x128xf32>
    %268 = vector.broadcast %38 : vector<1x1x128xf32> to vector<3x18x128xf32>
    %269 = arith.mulf %267, %268 : vector<3x18x128xf32>
    %270 = arith.addf %266, %269 : vector<3x18x128xf32>
    %271 = vector.broadcast %41 : vector<1x1x128xf32> to vector<3x18x128xf32>
    %272 = arith.addf %270, %271 : vector<3x18x128xf32>
    %c0_50 = arith.constant 0 : index
    %273 = arith.index_cast %230 : i32 to index
    %c0_51 = arith.constant 0 : index
    %c0_52 = arith.constant 0 : index
    %274 = vector.load %arg4[%c0_50, %273, %c0_51, %c0_52] : memref<1x18x18x128xf32, #tpu.memory_space<vmem>>, vector<1x3x18x128xf32>
    %275 = vector.shape_cast %274 : vector<1x3x18x128xf32> to vector<3x18x128xf32>
    %276 = vector.shape_cast %272 : vector<3x18x128xf32> to vector<1x3x18x128xf32>
    tpu.vector_store %arg4[%c0_50, %273, %c0_51, %c0_52], %276 {strides = array<i32>} : memref<1x18x18x128xf32, #tpu.memory_space<vmem>>, vector<1x3x18x128xf32>,
    %c5_i32 = arith.constant 5 : i32
    %c3_i32_53 = arith.constant 3 : i32
    %277 = arith.muli %c5_i32, %c3_i32_53 : i32
    %278 = arith.index_cast %277 : i32 to index
    %c0_54 = arith.constant 0 : index
    %c0_55 = arith.constant 0 : index
    %279 = vector.load %arg5[%278, %c0_54, %c0_55] : memref<20x20x128xf32, #tpu.memory_space<vmem>>, vector<5x20x128xf32>
    %280 = vector.extract_strided_slice %279 {offsets = [0, 0, 0], sizes = [5, 18, 128], strides = [1, 1, 1]} : vector<5x20x128xf32> to vector<5x18x128xf32>
    %281 = vector.extract_strided_slice %280 {offsets = [0, 0, 0], sizes = [3, 18, 128], strides = [1, 1, 1]} : vector<5x18x128xf32> to vector<3x18x128xf32>
    %282 = vector.broadcast %14 : vector<1x1x128xf32> to vector<3x18x128xf32>
    %283 = arith.mulf %281, %282 : vector<3x18x128xf32>
    %284 = vector.extract_strided_slice %280 {offsets = [1, 0, 0], sizes = [3, 18, 128], strides = [1, 1, 1]} : vector<5x18x128xf32> to vector<3x18x128xf32>
    %285 = vector.broadcast %23 : vector<1x1x128xf32> to vector<3x18x128xf32>
    %286 = arith.mulf %284, %285 : vector<3x18x128xf32>
    %287 = arith.addf %283, %286 : vector<3x18x128xf32>
    %288 = vector.extract_strided_slice %280 {offsets = [2, 0, 0], sizes = [3, 18, 128], strides = [1, 1, 1]} : vector<5x18x128xf32> to vector<3x18x128xf32>
    %289 = vector.broadcast %32 : vector<1x1x128xf32> to vector<3x18x128xf32>
    %290 = arith.mulf %288, %289 : vector<3x18x128xf32>
    %291 = arith.addf %287, %290 : vector<3x18x128xf32>
    %292 = vector.extract_strided_slice %279 {offsets = [0, 1, 0], sizes = [5, 18, 128], strides = [1, 1, 1]} : vector<5x20x128xf32> to vector<5x18x128xf32>
    %293 = vector.extract_strided_slice %292 {offsets = [0, 0, 0], sizes = [3, 18, 128], strides = [1, 1, 1]} : vector<5x18x128xf32> to vector<3x18x128xf32>
    %294 = vector.broadcast %17 : vector<1x1x128xf32> to vector<3x18x128xf32>
    %295 = arith.mulf %293, %294 : vector<3x18x128xf32>
    %296 = arith.addf %291, %295 : vector<3x18x128xf32>
    %297 = vector.extract_strided_slice %292 {offsets = [1, 0, 0], sizes = [3, 18, 128], strides = [1, 1, 1]} : vector<5x18x128xf32> to vector<3x18x128xf32>
    %298 = vector.broadcast %26 : vector<1x1x128xf32> to vector<3x18x128xf32>
    %299 = arith.mulf %297, %298 : vector<3x18x128xf32>
    %300 = arith.addf %296, %299 : vector<3x18x128xf32>
    %301 = vector.extract_strided_slice %292 {offsets = [2, 0, 0], sizes = [3, 18, 128], strides = [1, 1, 1]} : vector<5x18x128xf32> to vector<3x18x128xf32>
    %302 = vector.broadcast %35 : vector<1x1x128xf32> to vector<3x18x128xf32>
    %303 = arith.mulf %301, %302 : vector<3x18x128xf32>
    %304 = arith.addf %300, %303 : vector<3x18x128xf32>
    %305 = vector.extract_strided_slice %279 {offsets = [0, 2, 0], sizes = [5, 18, 128], strides = [1, 1, 1]} : vector<5x20x128xf32> to vector<5x18x128xf32>
    %306 = vector.extract_strided_slice %305 {offsets = [0, 0, 0], sizes = [3, 18, 128], strides = [1, 1, 1]} : vector<5x18x128xf32> to vector<3x18x128xf32>
    %307 = vector.broadcast %20 : vector<1x1x128xf32> to vector<3x18x128xf32>
    %308 = arith.mulf %306, %307 : vector<3x18x128xf32>
    %309 = arith.addf %304, %308 : vector<3x18x128xf32>
    %310 = vector.extract_strided_slice %305 {offsets = [1, 0, 0], sizes = [3, 18, 128], strides = [1, 1, 1]} : vector<5x18x128xf32> to vector<3x18x128xf32>
    %311 = vector.broadcast %29 : vector<1x1x128xf32> to vector<3x18x128xf32>
    %312 = arith.mulf %310, %311 : vector<3x18x128xf32>
    %313 = arith.addf %309, %312 : vector<3x18x128xf32>
    %314 = vector.extract_strided_slice %305 {offsets = [2, 0, 0], sizes = [3, 18, 128], strides = [1, 1, 1]} : vector<5x18x128xf32> to vector<3x18x128xf32>
    %315 = vector.broadcast %38 : vector<1x1x128xf32> to vector<3x18x128xf32>
    %316 = arith.mulf %314, %315 : vector<3x18x128xf32>
    %317 = arith.addf %313, %316 : vector<3x18x128xf32>
    %318 = vector.broadcast %41 : vector<1x1x128xf32> to vector<3x18x128xf32>
    %319 = arith.addf %317, %318 : vector<3x18x128xf32>
    %c0_56 = arith.constant 0 : index
    %320 = arith.index_cast %277 : i32 to index
    %c0_57 = arith.constant 0 : index
    %c0_58 = arith.constant 0 : index
    %321 = vector.load %arg4[%c0_56, %320, %c0_57, %c0_58] : memref<1x18x18x128xf32, #tpu.memory_space<vmem>>, vector<1x3x18x128xf32>
    %322 = vector.shape_cast %321 : vector<1x3x18x128xf32> to vector<3x18x128xf32>
    %323 = vector.shape_cast %319 : vector<3x18x128xf32> to vector<1x3x18x128xf32>
    tpu.vector_store %arg4[%c0_56, %320, %c0_57, %c0_58], %323 {strides = array<i32>} : memref<1x18x18x128xf32, #tpu.memory_space<vmem>>, vector<1x3x18x128xf32>,
    %c6_i32 = arith.constant 6 : i32
    return
  }
  func.func @transform_0(%arg0: i32) -> (i32, i32, i32, i32) {
    %c0_i32 = arith.constant 0 : i32
    %c0_i32_0 = arith.constant 0 : i32
    %c0_i32_1 = arith.constant 0 : i32
    %c0_i32_2 = arith.constant 0 : i32
    return %arg0, %c0_i32, %c0_i32_0, %c0_i32_1 : i32, i32, i32, i32
  }
  func.func @transform_1(%arg0: i32) -> (i32, i32) {
    %c0_i32 = arith.constant 0 : i32
    %c0_i32_0 = arith.constant 0 : i32
    %c0_i32_1 = arith.constant 0 : i32
    return %c0_i32, %c0_i32_0 : i32, i32
  }
  func.func @transform_2(%arg0: i32) -> (i32, i32) {
    %c0_i32 = arith.constant 0 : i32
    %c0_i32_0 = arith.constant 0 : i32
    %c0_i32_1 = arith.constant 0 : i32
    return %c0_i32, %c0_i32_0 : i32, i32
  }
  func.func @transform_3(%arg0: i32) -> (i32, i32, i32, i32) {
    %c0_i32 = arith.constant 0 : i32
    %c0_i32_0 = arith.constant 0 : i32
    %c0_i32_1 = arith.constant 0 : i32
    %c0_i32_2 = arith.constant 0 : i32
    return %arg0, %c0_i32, %c0_i32_0, %c0_i32_1 : i32, i32, i32, i32
  }
}

</mosaic_0001>

<llo_original>
// kernel: tpu_custom_call.1
$region0: #{tpu_custom_call.1}
  #allocation0 [shape = 'u32[]', space=smem, size = 0x4, offset = 0x4, fixed_abs, tag = 'smem constant byte address 0x4 - core index']
  #allocation1 [shape = 'u32[144,128]{1,0:T(1,128)}', space=vmem, size = 0x12000, scoped, tag = 'internal scratch']
  #allocation2 [shape = 'f32[20,20,128]{2,1,0:T(8,128)}', space=vmem, size = 0x3c000, scoped, tag = 'scratch operand']
  %s0 = inlined_call_operand.hbm [shape: f32[2,16,16,128], index: 0, kind: input, shape index: {}]
  %s1 = inlined_call_operand.hbm [shape: f32[9,128], index: 1, kind: input, shape index: {}]
  %s2 = inlined_call_operand.vmem [shape: f32[1,128], index: 2, kind: input, shape index: {}]
  %s3 = inlined_call_operand.vmem [shape: f32[2,18,18,128], index: 3, kind: output, shape index: {}]
  %s4 = sld [smem:[#allocation0]]
  $region53: #{tpu_custom_call.1} parent=0
    _
  %s6 = ssub.s32 1, %s4
  %s7 = scalar_select 0, %s6, %s4
  $region1: #{tpu_custom_call.1} parent=0
    #allocation3 [shape = 'u8[262144]{0}', space=vmem, size = 0x40000, scoped, tag = 'input window, operand 0']
    #allocation4 [shape = 's32[2]{0}', space=sflag, size = 0x8, scoped, tag = 'scoped memory for tpu_custom_call.1']
    #allocation5 [shape = 'u8[8192]{0}', space=vmem, size = 0x2000, scoped, tag = 'input window, operand 1, single buffered']
    #allocation6 [shape = 's32[1]{0}', space=sflag, size = 0x4, scoped, tag = 'scoped memory for tpu_custom_call.1']
    %8 = vsyncpa [#allocation4], 0
    %s9 = scalar_lea.sflag [#allocation4], 1
    %10 = vsyncpa %s9, 0
    %11 = vsyncpa [#allocation6], 0
    loop: start=0, step=1, limit=4
    $region2: #{tpu_custom_call.1} parent=1 // loop_pre_header
      _
    $region3: #{tpu_custom_call.1} parent=1 // loop_header
      %s13 = sphi 0, %s17
      %p14 = scmp.ge.s32.totalorder %s13, 4
      %s23 = sphi 0, %s25
      %s26 = sphi 0, %s23
      %s27 = sphi 0, %s26
      %s43 = sphi 0, %s27
      %s47 = sphi 0, %s47
      %s49 = sphi 0, %s47
      %s50 = sphi 0, %s49
      %s64 = sphi 0, %s50
      %s68 = sphi 0, %s68
      %s70 = sphi 0, %s68
      %s71 = sphi 0, %s70
      %s85 = sphi 0, %s71
      %s91 = sphi 0, %s93
      %s94 = sphi 0, %s91
      %s95 = sphi 0, %s94
      %s111 = sphi 0, %s95
    $region4: #{tpu_custom_call.1} parent=1 // loop_header_branch
      %16 = sbr.rel (%p14) target = $region8
    $region5: #{tpu_custom_call.1} parent=1 // loop_body
      %s18 = ssub.s32 %s13, 1
      %s19 = ssub.s32 %s13, 2
      %s20 = sadd.s32 %s13, 1
      %s21 = ssub.s32 %s13, %s20
      %p22 = scmp.eq.s32.totalorder %s21, 0
      %s24 = sadd.s32 %s23, 1
      %s25 = scalar_select %p22, %s23, %s24
      %p28 = pneg %p22
      %p29 = scmp.eq.s32.totalorder %s13, 1
      %p30 = por %p28, %p29
      %p31 = scmp.ne.s32.totalorder %s23, %s26
      %p32 = scmp.eq.s32.totalorder %s13, 0
      %p33 = por %p31, %p32
      %p34 = scmp.ne.s32.totalorder %s23, %s26
      %p35 = scmp.eq.s32.totalorder %s18, 1
      %p36 = por %p34, %p35
      %p37 = scmp.ne.s32.totalorder %s26, %s27
      %p38 = scmp.eq.s32.totalorder %s18, 0
      %p39 = por %p37, %p38
      %p40 = scmp.ne.s32.totalorder %s26, %s27
      %p41 = scmp.eq.s32.totalorder %s19, 1
      %p42 = por %p40, %p41
      %p44 = scmp.ne.s32.totalorder %s27, %s43
      %p45 = scmp.eq.s32.totalorder %s19, 0
      %p46 = por %p44, %p45
      %s48 = sadd.s32 %s47, 1
      %p51 = scmp.eq.s32.totalorder %s13, 1
      %p52 = scmp.ne.s32.totalorder %s47, %s49
      %p53 = scmp.eq.s32.totalorder %s13, 0
      %p54 = por %p52, %p53
      %p55 = scmp.ne.s32.totalorder %s47, %s49
      %p56 = scmp.eq.s32.totalorder %s18, 1
      %p57 = por %p55, %p56
      %p58 = scmp.ne.s32.totalorder %s49, %s50
      %p59 = scmp.eq.s32.totalorder %s18, 0
      %p60 = por %p58, %p59
      %p61 = scmp.ne.s32.totalorder %s49, %s50
      %p62 = scmp.eq.s32.totalorder %s19, 1
      %p63 = por %p61, %p62
      %p65 = scmp.ne.s32.totalorder %s50, %s64
      %p66 = scmp.eq.s32.totalorder %s19, 0
      %p67 = por %p65, %p66
      %s69 = sadd.s32 %s68, 1
      %p72 = scmp.eq.s32.totalorder %s13, 1
      %p73 = scmp.ne.s32.totalorder %s68, %s70
      %p74 = scmp.eq.s32.totalorder %s13, 0
      %p75 = por %p73, %p74
      %p76 = scmp.ne.s32.totalorder %s68, %s70
      %p77 = scmp.eq.s32.totalorder %s18, 1
      %p78 = por %p76, %p77
      %p79 = scmp.ne.s32.totalorder %s70, %s71
      %p80 = scmp.eq.s32.totalorder %s18, 0
      %p81 = por %p79, %p80
      %p82 = scmp.ne.s32.totalorder %s70, %s71
      %p83 = scmp.eq.s32.totalorder %s19, 1
      %p84 = por %p82, %p83
      %p86 = scmp.ne.s32.totalorder %s71, %s85
      %p87 = scmp.eq.s32.totalorder %s19, 0
      %p88 = por %p86, %p87
      %s89 = ssub.s32 %s13, %s20
      %p90 = scmp.eq.s32.totalorder %s89, 0
      %s92 = sadd.s32 %s91, 1
      %s93 = scalar_select %p90, %s91, %s92
      %p96 = pneg %p90
      %p97 = scmp.eq.s32.totalorder %s13, 1
      %p98 = por %p96, %p97
      %p99 = scmp.ne.s32.totalorder %s91, %s94
      %p100 = scmp.eq.s32.totalorder %s13, 0
      %p101 = por %p99, %p100
      %p102 = scmp.ne.s32.totalorder %s91, %s94
      %p103 = scmp.eq.s32.totalorder %s18, 1
      %p104 = por %p102, %p103
      %p105 = scmp.ne.s32.totalorder %s94, %s95
      %p106 = scmp.eq.s32.totalorder %s18, 0
      %p107 = por %p105, %p106
      %p108 = scmp.ne.s32.totalorder %s94, %s95
      %p109 = scmp.eq.s32.totalorder %s19, 1
      %p110 = por %p108, %p109
      %p112 = scmp.ne.s32.totalorder %s95, %s111
      %p113 = scmp.eq.s32.totalorder %s19, 0
      %p114 = por %p112, %p113
      %p115 = scmp.le.s32.totalorder 1, %s13
      %p116 = scmp.lt.s32.totalorder %s13, 3
      %p117 = pnand %p115, %p116
      %p118 = pneg %p117
      // Predicated region
      $region9: #{tpu_custom_call.1} parent=5 // pred_check
        _
      $region10: #{tpu_custom_call.1} parent=5 // pred_check_branch
        %120 = sbr.rel (%p117) target = $region12
      $region11: #{tpu_custom_call.1} parent=5 // pred_region
        %s121 = ssub.s32 %s13, 1
        // Predicated region
        $region13: #{tpu_custom_call.1} parent=11 // pred_check
          %p122 = pneg %p60
        $region14: #{tpu_custom_call.1} parent=11 // pred_check_branch
          %124 = sbr.rel (%p122) target = $region16
        $region15: #{tpu_custom_call.1} parent=11 // pred_region
          %s126 = ssub.s32 256, 256
          %127 = vsyncadd [#allocation6], %s126
          %s128 = sshll.u32 [#allocation5], 4
          %s129 = int_to_ptr.vmem [resolvable:$true] %s128
          %134 = dma.hbm_to_vmem [thread:$0]  %s1, 256, %s129, [#allocation6], 128, 128, 8
        $region16: #{tpu_custom_call.1} parent=11 // pred_fallthru
          _
        // Predicated region
        $region17: #{tpu_custom_call.1} parent=11 // pred_check
          %p135 = pneg %p81
        $region18: #{tpu_custom_call.1} parent=11 // pred_check_branch
          %137 = sbr.rel (%p135) target = $region20
        $region19: #{tpu_custom_call.1} parent=11 // pred_region
          _
        $region20: #{tpu_custom_call.1} parent=11 // pred_fallthru
          _
      $region12: #{tpu_custom_call.1} parent=5 // pred_fallthru
        _
      %p138 = scmp.lt.s32.totalorder %s13, 2
      // Predicated region
      $region21: #{tpu_custom_call.1} parent=5 // pred_check
        %p139 = pneg %p138
      $region22: #{tpu_custom_call.1} parent=5 // pred_check_branch
        %141 = sbr.rel (%p139) target = $region24
      $region23: #{tpu_custom_call.1} parent=5 // pred_region
        // Predicated region
        $region25: #{tpu_custom_call.1} parent=23 // pred_check
          %p142 = pneg %p33
        $region26: #{tpu_custom_call.1} parent=23 // pred_check_branch
          %144 = sbr.rel (%p142) target = $region28
        $region27: #{tpu_custom_call.1} parent=23 // pred_region
          %s145 = sand.u32 %s23, 1
          %s146 = scalar_lea.sflag [#allocation4], %s145
          %s147 = sand.u32 %s23, 1
          %s148 = smul.addr %s147, 256
          %s149 = scalar_lea.vmem [#allocation3], %s148
          %s151 = ssub.s32 4096, 4096
          %152 = vsyncadd %s146, %s151
          %s153 = smul.addr %s13, 32
          %s154 = smul.addr %s153, 128
          %s155 = scalar_lea.hbm %s0, %s154
          %s156 = sshll.u32 %s149, 4
          %s157 = int_to_ptr.vmem [resolvable:$true] %s156
          %162 = dma.hbm_to_vmem [thread:$0]  %s155, 4096, %s157, %s146, 128, 128, 8
        $region28: #{tpu_custom_call.1} parent=23 // pred_fallthru
          _
      $region24: #{tpu_custom_call.1} parent=5 // pred_fallthru
        _
      %p163 = scmp.le.s32.totalorder 1, %s13
      %p164 = scmp.lt.s32.totalorder %s13, 3
      %p165 = pnand %p163, %p164
      %p166 = pneg %p165
      // Predicated region
      $region29: #{tpu_custom_call.1} parent=5 // pred_check
        _
      $region30: #{tpu_custom_call.1} parent=5 // pred_check_branch
        %168 = sbr.rel (%p165) target = $region32
      $region31: #{tpu_custom_call.1} parent=5 // pred_region
        %s169 = ssub.s32 %s13, 1
        %s170 = sand.u32 %s26, 1
        %s171 = scalar_lea.sflag [#allocation4], %s170
        %s172 = sand.u32 %s26, 1
        %s173 = smul.addr %s172, 256
        %s174 = scalar_lea.vmem [#allocation3], %s173
        // Predicated region
        $region33: #{tpu_custom_call.1} parent=31 // pred_check
          %p175 = pneg %p39
        $region34: #{tpu_custom_call.1} parent=31 // pred_check_branch
          %177 = sbr.rel (%p175) target = $region36
        $region35: #{tpu_custom_call.1} parent=31 // pred_region
          %178 = dma.done %s171, 4096
        $region36: #{tpu_custom_call.1} parent=31 // pred_fallthru
          _
        // Predicated region
        $region37: #{tpu_custom_call.1} parent=31 // pred_check
          %p179 = pneg %p60
        $region38: #{tpu_custom_call.1} parent=31 // pred_check_branch
          %181 = sbr.rel (%p179) target = $region40
        $region39: #{tpu_custom_call.1} parent=31 // pred_region
          %182 = dma.done [#allocation6], 256
        $region40: #{tpu_custom_call.1} parent=31 // pred_fallthru
          _
        %s183 = sand.u32 %s26, 1
        %s184 = scalar_lea.sflag [#allocation4], %s183
        %s185 = sand.u32 %s26, 1
        %s186 = smul.addr %s185, 256
        %s187 = scalar_lea.vmem [#allocation3], %s186
        %p188 = pneg %p39
        %p189 = pneg %p36
        %p190 = pneg %p60
        %p191 = pneg %p57
        %p192 = pneg %p81
        %p193 = pneg %p78
        %p194 = pneg %p107
        %p195 = pneg %p104
        %p196 = scmp.lt.s32.totalorder %s18, 1
        %s197 = scalar_select %p196, %s18, 1
        %s198 = smul.addr %s197, 54
        %s199 = smul.addr %s198, 8
        %s200 = scalar_lea.vmem %s3, %s199
        %p201 = scmp.lt.s32.totalorder %s18, 1
        %s202 = scalar_select %p201, %s18, 1
        %s203 = smul.addr %s202, 54
        %s204 = smul.addr %s203, 8
        %s205 = scalar_lea.vmem %s3, %s204
        %206 = vst [vmem:[#allocation2] sm:$0xff] 0.0
        %207 = vst [vmem:[#allocation2 + $0x8] sm:$0xff] 0.0
        %208 = vst [vmem:[#allocation2 + $0x10] sm:$0xf] 0.0
        %209 = vst [vmem:[#allocation2 + $0x18] sm:$0xff] 0.0
        %210 = vst [vmem:[#allocation2 + $0x20] sm:$0xff] 0.0
        %211 = vst [vmem:[#allocation2 + $0x28] sm:$0xf] 0.0
        %s212 = scalar_lea.vmem [#allocation2], 432
        %213 = vst [vmem:[%s212] sm:$0xff] 0.0
        %214 = vst [vmem:[%s212 + $0x8] sm:$0xff] 0.0
        %215 = vst [vmem:[%s212 + $0x10] sm:$0xf] 0.0
        %216 = vst [vmem:[%s212 + $0x18] sm:$0xff] 0.0
        %217 = vst [vmem:[%s212 + $0x20] sm:$0xff] 0.0
        %218 = vst [vmem:[%s212 + $0x28] sm:$0xf] 0.0
        %s219 = scalar_lea.vmem [#allocation2], 48
        %220 = vst [vmem:[%s219] sm:$0x3] 0.0
        %221 = vst [vmem:[%s219 + $0x18] sm:$0x3] 0.0
        %222 = vst [vmem:[%s219 + $0x30] sm:$0x3] 0.0
        %223 = vst [vmem:[%s219 + $0x48] sm:$0x3] 0.0
        %224 = vst [vmem:[%s219 + $0x60] sm:$0x3] 0.0
        %225 = vst [vmem:[%s219 + $0x78] sm:$0x3] 0.0
        %226 = vst [vmem:[%s219 + $0x90] sm:$0x3] 0.0
        %227 = vst [vmem:[%s219 + $0xa8] sm:$0x3] 0.0
        %228 = vst [vmem:[%s219 + $0xc0] sm:$0x3] 0.0
        %229 = vst [vmem:[%s219 + $0xd8] sm:$0x3] 0.0
        %230 = vst [vmem:[%s219 + $0xf0] sm:$0x3] 0.0
        %231 = vst [vmem:[%s219 + $0x108] sm:$0x3] 0.0
        %232 = vst [vmem:[%s219 + $0x120] sm:$0x3] 0.0
        %233 = vst [vmem:[%s219 + $0x138] sm:$0x3] 0.0
        %234 = vst [vmem:[%s219 + $0x150] sm:$0x3] 0.0
        %235 = vst [vmem:[%s219 + $0x168] sm:$0x3] 0.0
        %236 = vst [vmem:[%s219 + $0x12] sm:$0x3] 0.0
        %237 = vst [vmem:[%s219 + $0x2a] sm:$0x3] 0.0
        %238 = vst [vmem:[%s219 + $0x42] sm:$0x3] 0.0
        %239 = vst [vmem:[%s219 + $0x5a] sm:$0x3] 0.0
        %240 = vst [vmem:[%s219 + $0x72] sm:$0x3] 0.0
        %241 = vst [vmem:[%s219 + $0x8a] sm:$0x3] 0.0
        %242 = vst [vmem:[%s219 + $0xa2] sm:$0x3] 0.0
        %243 = vst [vmem:[%s219 + $0xba] sm:$0x3] 0.0
        %244 = vst [vmem:[%s219 + $0xd2] sm:$0x3] 0.0
        %245 = vst [vmem:[%s219 + $0xea] sm:$0x3] 0.0
        %246 = vst [vmem:[%s219 + $0x102] sm:$0x3] 0.0
        %247 = vst [vmem:[%s219 + $0x11a] sm:$0x3] 0.0
        %248 = vst [vmem:[%s219 + $0x132] sm:$0x3] 0.0
        %249 = vst [vmem:[%s219 + $0x14a] sm:$0x3] 0.0
        %250 = vst [vmem:[%s219 + $0x162] sm:$0x3] 0.0
        %251 = vst [vmem:[%s219 + $0x17a] sm:$0x3] 0.0
        %v252 = vld [vmem:[%s174] sm:$0xff]
        %v253 = vld [vmem:[%s174 + $0x8] sm:$0xff]
        %v254 = vld [vmem:[%s174 + $0x10] sm:$0xff]
        %v255 = vld [vmem:[%s174 + $0x18] sm:$0xff]
        %v256 = vld [vmem:[%s174 + $0x20] sm:$0xff]
        %v257 = vld [vmem:[%s174 + $0x28] sm:$0xff]
        %v258 = vld [vmem:[%s174 + $0x30] sm:$0xff]
        %v259 = vld [vmem:[%s174 + $0x38] sm:$0xff]
        %v260 = vld [vmem:[%s174 + $0x40] sm:$0xff]
        %v261 = vld [vmem:[%s174 + $0x48] sm:$0xff]
        %v262 = vld [vmem:[%s174 + $0x50] sm:$0xff]
        %v263 = vld [vmem:[%s174 + $0x58] sm:$0xff]
        %v264 = vld [vmem:[%s174 + $0x60] sm:$0xff]
        %v265 = vld [vmem:[%s174 + $0x68] sm:$0xff]
        %v266 = vld [vmem:[%s174 + $0x70] sm:$0xff]
        %v267 = vld [vmem:[%s174 + $0x78] sm:$0xff]
        %v268 = vld [vmem:[%s174 + $0x80] sm:$0xff]
        %v269 = vld [vmem:[%s174 + $0x88] sm:$0xff]
        %v270 = vld [vmem:[%s174 + $0x90] sm:$0xff]
        %v271 = vld [vmem:[%s174 + $0x98] sm:$0xff]
        %v272 = vld [vmem:[%s174 + $0xa0] sm:$0xff]
        %v273 = vld [vmem:[%s174 + $0xa8] sm:$0xff]
        %v274 = vld [vmem:[%s174 + $0xb0] sm:$0xff]
        %v275 = vld [vmem:[%s174 + $0xb8] sm:$0xff]
        %v276 = vld [vmem:[%s174 + $0xc0] sm:$0xff]
        %v277 = vld [vmem:[%s174 + $0xc8] sm:$0xff]
        %v278 = vld [vmem:[%s174 + $0xd0] sm:$0xff]
        %v279 = vld [vmem:[%s174 + $0xd8] sm:$0xff]
        %v280 = vld [vmem:[%s174 + $0xe0] sm:$0xff]
        %v281 = vld [vmem:[%s174 + $0xe8] sm:$0xff]
        %v282 = vld [vmem:[%s174 + $0xf0] sm:$0xff]
        %v283 = vld [vmem:[%s174 + $0xf8] sm:$0xff]
        %284 = vst [vmem:[%s219 + $0x2] sm:$0xff] %v252
        %285 = vst [vmem:[%s219 + $0xa] sm:$0xff] %v253
        %286 = vst [vmem:[%s219 + $0x1a] sm:$0xff] %v254
        %287 = vst [vmem:[%s219 + $0x22] sm:$0xff] %v255
        %288 = vst [vmem:[%s219 + $0x32] sm:$0xff] %v256
        %289 = vst [vmem:[%s219 + $0x3a] sm:$0xff] %v257
        %290 = vst [vmem:[%s219 + $0x4a] sm:$0xff] %v258
        %291 = vst [vmem:[%s219 + $0x52] sm:$0xff] %v259
        %292 = vst [vmem:[%s219 + $0x62] sm:$0xff] %v260
        %293 = vst [vmem:[%s219 + $0x6a] sm:$0xff] %v261
        %294 = vst [vmem:[%s219 + $0x7a] sm:$0xff] %v262
        %295 = vst [vmem:[%s219 + $0x82] sm:$0xff] %v263
        %296 = vst [vmem:[%s219 + $0x92] sm:$0xff] %v264
        %297 = vst [vmem:[%s219 + $0x9a] sm:$0xff] %v265
        %298 = vst [vmem:[%s219 + $0xaa] sm:$0xff] %v266
        %299 = vst [vmem:[%s219 + $0xb2] sm:$0xff] %v267
        %300 = vst [vmem:[%s219 + $0xc2] sm:$0xff] %v268
        %301 = vst [vmem:[%s219 + $0xca] sm:$0xff] %v269
        %302 = vst [vmem:[%s219 + $0xda] sm:$0xff] %v270
        %303 = vst [vmem:[%s219 + $0xe2] sm:$0xff] %v271
        %304 = vst [vmem:[%s219 + $0xf2] sm:$0xff] %v272
        %305 = vst [vmem:[%s219 + $0xfa] sm:$0xff] %v273
        %306 = vst [vmem:[%s219 + $0x10a] sm:$0xff] %v274
        %307 = vst [vmem:[%s219 + $0x112] sm:$0xff] %v275
        %308 = vst [vmem:[%s219 + $0x122] sm:$0xff] %v276
        %309 = vst [vmem:[%s219 + $0x12a] sm:$0xff] %v277
        %310 = vst [vmem:[%s219 + $0x13a] sm:$0xff] %v278
        %311 = vst [vmem:[%s219 + $0x142] sm:$0xff] %v279
        %312 = vst [vmem:[%s219 + $0x152] sm:$0xff] %v280
        %313 = vst [vmem:[%s219 + $0x15a] sm:$0xff] %v281
        %314 = vst [vmem:[%s219 + $0x16a] sm:$0xff] %v282
        %315 = vst [vmem:[%s219 + $0x172] sm:$0xff] %v283
        %v316 = vld [vmem:[#allocation5] sm:$0xff]
        %v317 = vld [vmem:[#allocation5 + $0x8] sm:$0x1]
        %v318 = vld [vmem:[%s2] sm:$0x1]
        %v319 = vld [vmem:[#allocation2] sm:$0xff]
        %v320 = vld [vmem:[#allocation2 + $0x8] sm:$0xff]
        %v321 = vld [vmem:[#allocation2 + $0x10] sm:$0xf]
        %v322 = vld [vmem:[#allocation2 + $0x18] sm:$0xff]
        %v323 = vld [vmem:[#allocation2 + $0x20] sm:$0xff]
        %v324 = vld [vmem:[#allocation2 + $0x28] sm:$0xf]
        %v325 = vld [vmem:[#allocation2 + $0x30] sm:$0xff]
        %v326 = vld [vmem:[#allocation2 + $0x38] sm:$0xff]
        %v327 = vld [vmem:[#allocation2 + $0x40] sm:$0xf]
        %v328 = vld [vmem:[#allocation2 + $0x48] sm:$0xff]
        %v329 = vld [vmem:[#allocation2 + $0x50] sm:$0xff]
        %v330 = vld [vmem:[#allocation2 + $0x58] sm:$0xf]
        %v331 = vld [vmem:[#allocation2 + $0x60] sm:$0xff]
        %v332 = vld [vmem:[#allocation2 + $0x68] sm:$0xff]
        %v333 = vld [vmem:[#allocation2 + $0x70] sm:$0xf]
        %v334 = vlaneseq
        %v335 = vshrl.u32 %v334, 7
        %v336 = vsub.s32 0, %v335
        %v337 = vrot.slane %v316, %v336
        %v338 = vmul.f32 %v319, %v337
        %v339 = vmul.f32 %v320, %v337
        %v340 = vmul.f32 %v321, %v337
        %v341 = vmul.f32 %v322, %v337
        %v342 = vmul.f32 %v323, %v337
        %v343 = vmul.f32 %v324, %v337
        %v344 = vmul.f32 %v325, %v337
        %v345 = vmul.f32 %v326, %v337
        %v346 = vmul.f32 %v327, %v337
        %v347 = vlaneseq
        %v348 = vshrl.u32 %v347, 7
        %v349 = vsub.s32 3, %v348
        %v350 = vrot.slane %v316, %v349
        %v351 = vmul.f32 %v322, %v350
        %v352 = vmul.f32 %v323, %v350
        %v353 = vmul.f32 %v324, %v350
        %v354 = vmul.f32 %v325, %v350
        %v355 = vmul.f32 %v326, %v350
        %v356 = vmul.f32 %v327, %v350
        %v357 = vmul.f32 %v328, %v350
        %v358 = vmul.f32 %v329, %v350
        %v359 = vmul.f32 %v330, %v350
        %v360 = vadd.f32 %v338, %v351
        %v361 = vadd.f32 %v339, %v352
        %v362 = vadd.f32 %v340, %v353
        %v363 = vadd.f32 %v341, %v354
        %v364 = vadd.f32 %v342, %v355
        %v365 = vadd.f32 %v343, %v356
        %v366 = vadd.f32 %v344, %v357
        %v367 = vadd.f32 %v345, %v358
        %v368 = vadd.f32 %v346, %v359
        %v369 = vlaneseq
        %v370 = vshrl.u32 %v369, 7
        %v371 = vsub.s32 6, %v370
        %v372 = vrot.slane %v316, %v371
        %v373 = vmul.f32 %v325, %v372
        %v374 = vmul.f32 %v326, %v372
        %v375 = vmul.f32 %v327, %v372
        %v376 = vmul.f32 %v328, %v372
        %v377 = vmul.f32 %v329, %v372
        %v378 = vmul.f32 %v330, %v372
        %v379 = vmul.f32 %v331, %v372
        %v380 = vmul.f32 %v332, %v372
        %v381 = vmul.f32 %v333, %v372
        %v382 = vadd.f32 %v360, %v373
        %v383 = vadd.f32 %v361, %v374
        %v384 = vadd.f32 %v362, %v375
        %v385 = vadd.f32 %v363, %v376
        %v386 = vadd.f32 %v364, %v377
        %v387 = vadd.f32 %v365, %v378
        %v388 = vadd.f32 %v366, %v379
        %v389 = vadd.f32 %v367, %v380
        %v390 = vadd.f32 %v368, %v381
        %v391 = vlaneseq
        %v392 = vshrl.u32 %v391, 7
        %v393 = vsub.s32 1, %v392
        %v394 = vrot.slane %v316, %v393
        %v395 = vmul.f32 %v319, %v394
        %v396 = vmul.f32 %v320, %v394
        %v397 = vmul.f32 %v321, %v394
        %v398 = vmul.f32 %v322, %v394
        %v399 = vmul.f32 %v323, %v394
        %v400 = vmul.f32 %v324, %v394
        %v401 = vmul.f32 %v325, %v394
        %v402 = vmul.f32 %v326, %v394
        %v403 = vmul.f32 %v327, %v394
        %vm413 = vcmask 1046528
        %v414 = vrot.slane %v395, 1
        %v415 = vrot.slane %v396, 1
        %v416 = vsel %vm413, %v414, %v415
        %v417 = vrot.slane %v397, 1
        %v418 = vsel %vm413, %v415, %v417
        %v419 = vrot.slane %v398, 1
        %v420 = vrot.slane %v399, 1
        %v421 = vsel %vm413, %v419, %v420
        %v422 = vrot.slane %v400, 1
        %v423 = vsel %vm413, %v420, %v422
        %v424 = vrot.slane %v401, 1
        %v425 = vrot.slane %v402, 1
        %v426 = vsel %vm413, %v424, %v425
        %v427 = vrot.slane %v403, 1
        %v428 = vsel %vm413, %v425, %v427
        %v438 = vadd.f32 %v382, %v416
        %v439 = vadd.f32 %v383, %v418
        %v440 = vadd.f32 %v384, %v417
        %v441 = vadd.f32 %v385, %v421
        %v442 = vadd.f32 %v386, %v423
        %v443 = vadd.f32 %v387, %v422
        %v444 = vadd.f32 %v388, %v426
        %v445 = vadd.f32 %v389, %v428
        %v446 = vadd.f32 %v390, %v427
        %v447 = vlaneseq
        %v448 = vshrl.u32 %v447, 7
        %v449 = vsub.s32 4, %v448
        %v450 = vrot.slane %v316, %v449
        %v451 = vmul.f32 %v322, %v450
        %v452 = vmul.f32 %v323, %v450
        %v453 = vmul.f32 %v324, %v450
        %v454 = vmul.f32 %v325, %v450
        %v455 = vmul.f32 %v326, %v450
        %v456 = vmul.f32 %v327, %v450
        %v457 = vmul.f32 %v328, %v450
        %v458 = vmul.f32 %v329, %v450
        %v459 = vmul.f32 %v330, %v450
        %v469 = vrot.slane %v451, 1
        %v470 = vrot.slane %v452, 1
        %v471 = vsel %vm413, %v469, %v470
        %v472 = vrot.slane %v453, 1
        %v473 = vsel %vm413, %v470, %v472
        %v474 = vrot.slane %v454, 1
        %v475 = vrot.slane %v455, 1
        %v476 = vsel %vm413, %v474, %v475
        %v477 = vrot.slane %v456, 1
        %v478 = vsel %vm413, %v475, %v477
        %v479 = vrot.slane %v457, 1
        %v480 = vrot.slane %v458, 1
        %v481 = vsel %vm413, %v479, %v480
        %v482 = vrot.slane %v459, 1
        %v483 = vsel %vm413, %v480, %v482
        %v493 = vadd.f32 %v438, %v471
        %v494 = vadd.f32 %v439, %v473
        %v495 = vadd.f32 %v440, %v472
        %v496 = vadd.f32 %v441, %v476
        %v497 = vadd.f32 %v442, %v478
        %v498 = vadd.f32 %v443, %v477
        %v499 = vadd.f32 %v444, %v481
        %v500 = vadd.f32 %v445, %v483
        %v501 = vadd.f32 %v446, %v482
        %v502 = vlaneseq
        %v503 = vshrl.u32 %v502, 7
        %v504 = vsub.s32 7, %v503
        %v505 = vrot.slane %v316, %v504
        %v506 = vmul.f32 %v325, %v505
        %v507 = vmul.f32 %v326, %v505
        %v508 = vmul.f32 %v327, %v505
        %v509 = vmul.f32 %v328, %v505
        %v510 = vmul.f32 %v329, %v505
        %v511 = vmul.f32 %v330, %v505
        %v512 = vmul.f32 %v331, %v505
        %v513 = vmul.f32 %v332, %v505
        %v514 = vmul.f32 %v333, %v505
        %v524 = vrot.slane %v506, 1
        %v525 = vrot.slane %v507, 1
        %v526 = vsel %vm413, %v524, %v525
        %v527 = vrot.slane %v508, 1
        %v528 = vsel %vm413, %v525, %v527
        %v529 = vrot.slane %v509, 1
        %v530 = vrot.slane %v510, 1
        %v531 = vsel %vm413, %v529, %v530
        %v532 = vrot.slane %v511, 1
        %v533 = vsel %vm413, %v530, %v532
        %v534 = vrot.slane %v512, 1
        %v535 = vrot.slane %v513, 1
        %v536 = vsel %vm413, %v534, %v535
        %v537 = vrot.slane %v514, 1
        %v538 = vsel %vm413, %v535, %v537
        %v548 = vadd.f32 %v493, %v526
        %v549 = vadd.f32 %v494, %v528
        %v550 = vadd.f32 %v495, %v527
        %v551 = vadd.f32 %v496, %v531
        %v552 = vadd.f32 %v497, %v533
        %v553 = vadd.f32 %v498, %v532
        %v554 = vadd.f32 %v499, %v536
        %v555 = vadd.f32 %v500, %v538
        %v556 = vadd.f32 %v501, %v537
        %v557 = vlaneseq
        %v558 = vshrl.u32 %v557, 7
        %v559 = vsub.s32 2, %v558
        %v560 = vrot.slane %v316, %v559
        %v561 = vmul.f32 %v319, %v560
        %v562 = vmul.f32 %v320, %v560
        %v563 = vmul.f32 %v321, %v560
        %v564 = vmul.f32 %v322, %v560
        %v565 = vmul.f32 %v323, %v560
        %v566 = vmul.f32 %v324, %v560
        %v567 = vmul.f32 %v325, %v560
        %v568 = vmul.f32 %v326, %v560
        %v569 = vmul.f32 %v327, %v560
        %vm579 = vcmask 1045504
        %v580 = vrot.slane %v561, 2
        %v581 = vrot.slane %v562, 2
        %v582 = vsel %vm579, %v580, %v581
        %v583 = vrot.slane %v563, 2
        %v584 = vsel %vm579, %v581, %v583
        %v585 = vrot.slane %v564, 2
        %v586 = vrot.slane %v565, 2
        %v587 = vsel %vm579, %v585, %v586
        %v588 = vrot.slane %v566, 2
        %v589 = vsel %vm579, %v586, %v588
        %v590 = vrot.slane %v567, 2
        %v591 = vrot.slane %v568, 2
        %v592 = vsel %vm579, %v590, %v591
        %v593 = vrot.slane %v569, 2
        %v594 = vsel %vm579, %v591, %v593
        %v604 = vadd.f32 %v548, %v582
        %v605 = vadd.f32 %v549, %v584
        %v606 = vadd.f32 %v550, %v583
        %v607 = vadd.f32 %v551, %v587
        %v608 = vadd.f32 %v552, %v589
        %v609 = vadd.f32 %v553, %v588
        %v610 = vadd.f32 %v554, %v592
        %v611 = vadd.f32 %v555, %v594
        %v612 = vadd.f32 %v556, %v593
        %v613 = vlaneseq
        %v614 = vshrl.u32 %v613, 7
        %v615 = vsub.s32 5, %v614
        %v616 = vrot.slane %v316, %v615
        %v617 = vmul.f32 %v322, %v616
        %v618 = vmul.f32 %v323, %v616
        %v619 = vmul.f32 %v324, %v616
        %v620 = vmul.f32 %v325, %v616
        %v621 = vmul.f32 %v326, %v616
        %v622 = vmul.f32 %v327, %v616
        %v623 = vmul.f32 %v328, %v616
        %v624 = vmul.f32 %v329, %v616
        %v625 = vmul.f32 %v330, %v616
        %v635 = vrot.slane %v617, 2
        %v636 = vrot.slane %v618, 2
        %v637 = vsel %vm579, %v635, %v636
        %v638 = vrot.slane %v619, 2
        %v639 = vsel %vm579, %v636, %v638
        %v640 = vrot.slane %v620, 2
        %v641 = vrot.slane %v621, 2
        %v642 = vsel %vm579, %v640, %v641
        %v643 = vrot.slane %v622, 2
        %v644 = vsel %vm579, %v641, %v643
        %v645 = vrot.slane %v623, 2
        %v646 = vrot.slane %v624, 2
        %v647 = vsel %vm579, %v645, %v646
        %v648 = vrot.slane %v625, 2
        %v649 = vsel %vm579, %v646, %v648
        %v659 = vadd.f32 %v604, %v637
        %v660 = vadd.f32 %v605, %v639
        %v661 = vadd.f32 %v606, %v638
        %v662 = vadd.f32 %v607, %v642
        %v663 = vadd.f32 %v608, %v644
        %v664 = vadd.f32 %v609, %v643
        %v665 = vadd.f32 %v610, %v647
        %v666 = vadd.f32 %v611, %v649
        %v667 = vadd.f32 %v612, %v648
        %v668 = vlaneseq
        %v669 = vshrl.u32 %v668, 7
        %v670 = vsub.s32 0, %v669
        %v671 = vrot.slane %v317, %v670
        %v672 = vmul.f32 %v325, %v671
        %v673 = vmul.f32 %v326, %v671
        %v674 = vmul.f32 %v327, %v671
        %v675 = vmul.f32 %v328, %v671
        %v676 = vmul.f32 %v329, %v671
        %v677 = vmul.f32 %v330, %v671
        %v678 = vmul.f32 %v331, %v671
        %v679 = vmul.f32 %v332, %v671
        %v680 = vmul.f32 %v333, %v671
        %v690 = vrot.slane %v672, 2
        %v691 = vrot.slane %v673, 2
        %v692 = vsel %vm579, %v690, %v691
        %v693 = vrot.slane %v674, 2
        %v694 = vsel %vm579, %v691, %v693
        %v695 = vrot.slane %v675, 2
        %v696 = vrot.slane %v676, 2
        %v697 = vsel %vm579, %v695, %v696
        %v698 = vrot.slane %v677, 2
        %v699 = vsel %vm579, %v696, %v698
        %v700 = vrot.slane %v678, 2
        %v701 = vrot.slane %v679, 2
        %v702 = vsel %vm579, %v700, %v701
        %v703 = vrot.slane %v680, 2
        %v704 = vsel %vm579, %v701, %v703
        %v714 = vadd.f32 %v659, %v692
        %v715 = vadd.f32 %v660, %v694
        %v716 = vadd.f32 %v661, %v693
        %v717 = vadd.f32 %v662, %v697
        %v718 = vadd.f32 %v663, %v699
        %v719 = vadd.f32 %v664, %v698
        %v720 = vadd.f32 %v665, %v702
        %v721 = vadd.f32 %v666, %v704
        %v722 = vadd.f32 %v667, %v703
        %v724 = vlaneseq
        %v725 = vshrl.u32 %v724, 7
        %v726 = vsub.s32 0, %v725
        %v727 = vrot.slane %v318, %v726
        %v729 = vadd.f32 %v714, %v727
        %v730 = vadd.f32 %v715, %v727
        %v731 = vadd.f32 %v716, %v727
        %v732 = vadd.f32 %v717, %v727
        %v733 = vadd.f32 %v718, %v727
        %v734 = vadd.f32 %v719, %v727
        %v735 = vadd.f32 %v720, %v727
        %v736 = vadd.f32 %v721, %v727
        %v737 = vadd.f32 %v722, %v727
        %738 = vst [vmem:[%s205] sm:$0xff] %v729
        %739 = vst [vmem:[%s205 + $0x8] sm:$0xff] %v730
        %740 = vst [vmem:[%s205 + $0x10] sm:$0x3] %v731
        %741 = vst [vmem:[%s205 + $0x18] sm:$0xff] %v732
        %742 = vst [vmem:[%s205 + $0x20] sm:$0xff] %v733
        %743 = vst [vmem:[%s205 + $0x28] sm:$0x3] %v734
        %744 = vst [vmem:[%s205 + $0x30] sm:$0xff] %v735
        %745 = vst [vmem:[%s205 + $0x38] sm:$0xff] %v736
        %746 = vst [vmem:[%s205 + $0x40] sm:$0x3] %v737
        %s747 = scalar_lea.vmem [#allocation2], 72
        %v748 = vld [vmem:[%s747] sm:$0xff]
        %v749 = vld [vmem:[%s747 + $0x8] sm:$0xff]
        %v750 = vld [vmem:[%s747 + $0x10] sm:$0xf]
        %v751 = vld [vmem:[%s747 + $0x18] sm:$0xff]
        %v752 = vld [vmem:[%s747 + $0x20] sm:$0xff]
        %v753 = vld [vmem:[%s747 + $0x28] sm:$0xf]
        %v754 = vld [vmem:[%s747 + $0x30] sm:$0xff]
        %v755 = vld [vmem:[%s747 + $0x38] sm:$0xff]
        %v756 = vld [vmem:[%s747 + $0x40] sm:$0xf]
        %v757 = vld [vmem:[%s747 + $0x48] sm:$0xff]
        %v758 = vld [vmem:[%s747 + $0x50] sm:$0xff]
        %v759 = vld [vmem:[%s747 + $0x58] sm:$0xf]
        %v760 = vld [vmem:[%s747 + $0x60] sm:$0xff]
        %v761 = vld [vmem:[%s747 + $0x68] sm:$0xff]
        %v762 = vld [vmem:[%s747 + $0x70] sm:$0xf]
        %v763 = vmul.f32 %v748, %v337
        %v764 = vmul.f32 %v749, %v337
        %v765 = vmul.f32 %v750, %v337
        %v766 = vmul.f32 %v751, %v337
        %v767 = vmul.f32 %v752, %v337
        %v768 = vmul.f32 %v753, %v337
        %v769 = vmul.f32 %v754, %v337
        %v770 = vmul.f32 %v755, %v337
        %v771 = vmul.f32 %v756, %v337
        %v772 = vmul.f32 %v751, %v350
        %v773 = vmul.f32 %v752, %v350
        %v774 = vmul.f32 %v753, %v350
        %v775 = vmul.f32 %v754, %v350
        %v776 = vmul.f32 %v755, %v350
        %v777 = vmul.f32 %v756, %v350
        %v778 = vmul.f32 %v757, %v350
        %v779 = vmul.f32 %v758, %v350
        %v780 = vmul.f32 %v759, %v350
        %v781 = vadd.f32 %v763, %v772
        %v782 = vadd.f32 %v764, %v773
        %v783 = vadd.f32 %v765, %v774
        %v784 = vadd.f32 %v766, %v775
        %v785 = vadd.f32 %v767, %v776
        %v786 = vadd.f32 %v768, %v777
        %v787 = vadd.f32 %v769, %v778
        %v788 = vadd.f32 %v770, %v779
        %v789 = vadd.f32 %v771, %v780
        %v790 = vmul.f32 %v754, %v372
        %v791 = vmul.f32 %v755, %v372
        %v792 = vmul.f32 %v756, %v372
        %v793 = vmul.f32 %v757, %v372
        %v794 = vmul.f32 %v758, %v372
        %v795 = vmul.f32 %v759, %v372
        %v796 = vmul.f32 %v760, %v372
        %v797 = vmul.f32 %v761, %v372
        %v798 = vmul.f32 %v762, %v372
        %v799 = vadd.f32 %v781, %v790
        %v800 = vadd.f32 %v782, %v791
        %v801 = vadd.f32 %v783, %v792
        %v802 = vadd.f32 %v784, %v793
        %v803 = vadd.f32 %v785, %v794
        %v804 = vadd.f32 %v786, %v795
        %v805 = vadd.f32 %v787, %v796
        %v806 = vadd.f32 %v788, %v797
        %v807 = vadd.f32 %v789, %v798
        %v808 = vmul.f32 %v748, %v394
        %v809 = vmul.f32 %v749, %v394
        %v810 = vmul.f32 %v750, %v394
        %v811 = vmul.f32 %v751, %v394
        %v812 = vmul.f32 %v752, %v394
        %v813 = vmul.f32 %v753, %v394
        %v814 = vmul.f32 %v754, %v394
        %v815 = vmul.f32 %v755, %v394
        %v816 = vmul.f32 %v756, %v394
        %v826 = vrot.slane %v808, 1
        %v827 = vrot.slane %v809, 1
        %v828 = vsel %vm413, %v826, %v827
        %v829 = vrot.slane %v810, 1
        %v830 = vsel %vm413, %v827, %v829
        %v831 = vrot.slane %v811, 1
        %v832 = vrot.slane %v812, 1
        %v833 = vsel %vm413, %v831, %v832
        %v834 = vrot.slane %v813, 1
        %v835 = vsel %vm413, %v832, %v834
        %v836 = vrot.slane %v814, 1
        %v837 = vrot.slane %v815, 1
        %v838 = vsel %vm413, %v836, %v837
        %v839 = vrot.slane %v816, 1
        %v840 = vsel %vm413, %v837, %v839
        %v850 = vadd.f32 %v799, %v828
        %v851 = vadd.f32 %v800, %v830
        %v852 = vadd.f32 %v801, %v829
        %v853 = vadd.f32 %v802, %v833
        %v854 = vadd.f32 %v803, %v835
        %v855 = vadd.f32 %v804, %v834
        %v856 = vadd.f32 %v805, %v838
        %v857 = vadd.f32 %v806, %v840
        %v858 = vadd.f32 %v807, %v839
        %v859 = vmul.f32 %v751, %v450
        %v860 = vmul.f32 %v752, %v450
        %v861 = vmul.f32 %v753, %v450
        %v862 = vmul.f32 %v754, %v450
        %v863 = vmul.f32 %v755, %v450
        %v864 = vmul.f32 %v756, %v450
        %v865 = vmul.f32 %v757, %v450
        %v866 = vmul.f32 %v758, %v450
        %v867 = vmul.f32 %v759, %v450
        %v877 = vrot.slane %v859, 1
        %v878 = vrot.slane %v860, 1
        %v879 = vsel %vm413, %v877, %v878
        %v880 = vrot.slane %v861, 1
        %v881 = vsel %vm413, %v878, %v880
        %v882 = vrot.slane %v862, 1
        %v883 = vrot.slane %v863, 1
        %v884 = vsel %vm413, %v882, %v883
        %v885 = vrot.slane %v864, 1
        %v886 = vsel %vm413, %v883, %v885
        %v887 = vrot.slane %v865, 1
        %v888 = vrot.slane %v866, 1
        %v889 = vsel %vm413, %v887, %v888
        %v890 = vrot.slane %v867, 1
        %v891 = vsel %vm413, %v888, %v890
        %v901 = vadd.f32 %v850, %v879
        %v902 = vadd.f32 %v851, %v881
        %v903 = vadd.f32 %v852, %v880
        %v904 = vadd.f32 %v853, %v884
        %v905 = vadd.f32 %v854, %v886
        %v906 = vadd.f32 %v855, %v885
        %v907 = vadd.f32 %v856, %v889
        %v908 = vadd.f32 %v857, %v891
        %v909 = vadd.f32 %v858, %v890
        %v910 = vmul.f32 %v754, %v505
        %v911 = vmul.f32 %v755, %v505
        %v912 = vmul.f32 %v756, %v505
        %v913 = vmul.f32 %v757, %v505
        %v914 = vmul.f32 %v758, %v505
        %v915 = vmul.f32 %v759, %v505
        %v916 = vmul.f32 %v760, %v505
        %v917 = vmul.f32 %v761, %v505
        %v918 = vmul.f32 %v762, %v505
        %v928 = vrot.slane %v910, 1
        %v929 = vrot.slane %v911, 1
        %v930 = vsel %vm413, %v928, %v929
        %v931 = vrot.slane %v912, 1
        %v932 = vsel %vm413, %v929, %v931
        %v933 = vrot.slane %v913, 1
        %v934 = vrot.slane %v914, 1
        %v935 = vsel %vm413, %v933, %v934
        %v936 = vrot.slane %v915, 1
        %v937 = vsel %vm413, %v934, %v936
        %v938 = vrot.slane %v916, 1
        %v939 = vrot.slane %v917, 1
        %v940 = vsel %vm413, %v938, %v939
        %v941 = vrot.slane %v918, 1
        %v942 = vsel %vm413, %v939, %v941
        %v952 = vadd.f32 %v901, %v930
        %v953 = vadd.f32 %v902, %v932
        %v954 = vadd.f32 %v903, %v931
        %v955 = vadd.f32 %v904, %v935
        %v956 = vadd.f32 %v905, %v937
        %v957 = vadd.f32 %v906, %v936
        %v958 = vadd.f32 %v907, %v940
        %v959 = vadd.f32 %v908, %v942
        %v960 = vadd.f32 %v909, %v941
        %v961 = vmul.f32 %v748, %v560
        %v962 = vmul.f32 %v749, %v560
        %v963 = vmul.f32 %v750, %v560
        %v964 = vmul.f32 %v751, %v560
        %v965 = vmul.f32 %v752, %v560
        %v966 = vmul.f32 %v753, %v560
        %v967 = vmul.f32 %v754, %v560
        %v968 = vmul.f32 %v755, %v560
        %v969 = vmul.f32 %v756, %v560
        %v979 = vrot.slane %v961, 2
        %v980 = vrot.slane %v962, 2
        %v981 = vsel %vm579, %v979, %v980
        %v982 = vrot.slane %v963, 2
        %v983 = vsel %vm579, %v980, %v982
        %v984 = vrot.slane %v964, 2
        %v985 = vrot.slane %v965, 2
        %v986 = vsel %vm579, %v984, %v985
        %v987 = vrot.slane %v966, 2
        %v988 = vsel %vm579, %v985, %v987
        %v989 = vrot.slane %v967, 2
        %v990 = vrot.slane %v968, 2
        %v991 = vsel %vm579, %v989, %v990
        %v992 = vrot.slane %v969, 2
        %v993 = vsel %vm579, %v990, %v992
        %v1003 = vadd.f32 %v952, %v981
        %v1004 = vadd.f32 %v953, %v983
        %v1005 = vadd.f32 %v954, %v982
        %v1006 = vadd.f32 %v955, %v986
        %v1007 = vadd.f32 %v956, %v988
        %v1008 = vadd.f32 %v957, %v987
        %v1009 = vadd.f32 %v958, %v991
        %v1010 = vadd.f32 %v959, %v993
        %v1011 = vadd.f32 %v960, %v992
        %v1012 = vmul.f32 %v751, %v616
        %v1013 = vmul.f32 %v752, %v616
        %v1014 = vmul.f32 %v753, %v616
        %v1015 = vmul.f32 %v754, %v616
        %v1016 = vmul.f32 %v755, %v616
        %v1017 = vmul.f32 %v756, %v616
        %v1018 = vmul.f32 %v757, %v616
        %v1019 = vmul.f32 %v758, %v616
        %v1020 = vmul.f32 %v759, %v616
        %v1030 = vrot.slane %v1012, 2
        %v1031 = vrot.slane %v1013, 2
        %v1032 = vsel %vm579, %v1030, %v1031
        %v1033 = vrot.slane %v1014, 2
        %v1034 = vsel %vm579, %v1031, %v1033
        %v1035 = vrot.slane %v1015, 2
        %v1036 = vrot.slane %v1016, 2
        %v1037 = vsel %vm579, %v1035, %v1036
        %v1038 = vrot.slane %v1017, 2
        %v1039 = vsel %vm579, %v1036, %v1038
        %v1040 = vrot.slane %v1018, 2
        %v1041 = vrot.slane %v1019, 2
        %v1042 = vsel %vm579, %v1040, %v1041
        %v1043 = vrot.slane %v1020, 2
        %v1044 = vsel %vm579, %v1041, %v1043
        %v1054 = vadd.f32 %v1003, %v1032
        %v1055 = vadd.f32 %v1004, %v1034
        %v1056 = vadd.f32 %v1005, %v1033
        %v1057 = vadd.f32 %v1006, %v1037
        %v1058 = vadd.f32 %v1007, %v1039
        %v1059 = vadd.f32 %v1008, %v1038
        %v1060 = vadd.f32 %v1009, %v1042
        %v1061 = vadd.f32 %v1010, %v1044
        %v1062 = vadd.f32 %v1011, %v1043
        %v1063 = vmul.f32 %v754, %v671
        %v1064 = vmul.f32 %v755, %v671
        %v1065 = vmul.f32 %v756, %v671
        %v1066 = vmul.f32 %v757, %v671
        %v1067 = vmul.f32 %v758, %v671
        %v1068 = vmul.f32 %v759, %v671
        %v1069 = vmul.f32 %v760, %v671
        %v1070 = vmul.f32 %v761, %v671
        %v1071 = vmul.f32 %v762, %v671
        %v1081 = vrot.slane %v1063, 2
        %v1082 = vrot.slane %v1064, 2
        %v1083 = vsel %vm579, %v1081, %v1082
        %v1084 = vrot.slane %v1065, 2
        %v1085 = vsel %vm579, %v1082, %v1084
        %v1086 = vrot.slane %v1066, 2
        %v1087 = vrot.slane %v1067, 2
        %v1088 = vsel %vm579, %v1086, %v1087
        %v1089 = vrot.slane %v1068, 2
        %v1090 = vsel %vm579, %v1087, %v1089
        %v1091 = vrot.slane %v1069, 2
        %v1092 = vrot.slane %v1070, 2
        %v1093 = vsel %vm579, %v1091, %v1092
        %v1094 = vrot.slane %v1071, 2
        %v1095 = vsel %vm579, %v1092, %v1094
        %v1105 = vadd.f32 %v1054, %v1083
        %v1106 = vadd.f32 %v1055, %v1085
        %v1107 = vadd.f32 %v1056, %v1084
        %v1108 = vadd.f32 %v1057, %v1088
        %v1109 = vadd.f32 %v1058, %v1090
        %v1110 = vadd.f32 %v1059, %v1089
        %v1111 = vadd.f32 %v1060, %v1093
        %v1112 = vadd.f32 %v1061, %v1095
        %v1113 = vadd.f32 %v1062, %v1094
        %v1114 = vadd.f32 %v1105, %v727
        %v1115 = vadd.f32 %v1106, %v727
        %v1116 = vadd.f32 %v1107, %v727
        %v1117 = vadd.f32 %v1108, %v727
        %v1118 = vadd.f32 %v1109, %v727
        %v1119 = vadd.f32 %v1110, %v727
        %v1120 = vadd.f32 %v1111, %v727
        %v1121 = vadd.f32 %v1112, %v727
        %v1122 = vadd.f32 %v1113, %v727
        %s1123 = scalar_lea.vmem %s205, 72
        %1124 = vst [vmem:[%s1123] sm:$0xff] %v1114
        %1125 = vst [vmem:[%s1123 + $0x8] sm:$0xff] %v1115
        %1126 = vst [vmem:[%s1123 + $0x10] sm:$0x3] %v1116
        %1127 = vst [vmem:[%s1123 + $0x18] sm:$0xff] %v1117
        %1128 = vst [vmem:[%s1123 + $0x20] sm:$0xff] %v1118
        %1129 = vst [vmem:[%s1123 + $0x28] sm:$0x3] %v1119
        %1130 = vst [vmem:[%s1123 + $0x30] sm:$0xff] %v1120
        %1131 = vst [vmem:[%s1123 + $0x38] sm:$0xff] %v1121
        %1132 = vst [vmem:[%s1123 + $0x40] sm:$0x3] %v1122
        %s1133 = scalar_lea.vmem [#allocation2], 144
        %v1134 = vld [vmem:[%s1133] sm:$0xff]
        %v1135 = vld [vmem:[%s1133 + $0x8] sm:$0xff]
        %v1136 = vld [vmem:[%s1133 + $0x10] sm:$0xf]
        %v1137 = vld [vmem:[%s1133 + $0x18] sm:$0xff]
        %v1138 = vld [vmem:[%s1133 + $0x20] sm:$0xff]
        %v1139 = vld [vmem:[%s1133 + $0x28] sm:$0xf]
        %v1140 = vld [vmem:[%s1133 + $0x30] sm:$0xff]
        %v1141 = vld [vmem:[%s1133 + $0x38] sm:$0xff]
        %v1142 = vld [vmem:[%s1133 + $0x40] sm:$0xf]
        %v1143 = vld [vmem:[%s1133 + $0x48] sm:$0xff]
        %v1144 = vld [vmem:[%s1133 + $0x50] sm:$0xff]
        %v1145 = vld [vmem:[%s1133 + $0x58] sm:$0xf]
        %v1146 = vld [vmem:[%s1133 + $0x60] sm:$0xff]
        %v1147 = vld [vmem:[%s1133 + $0x68] sm:$0xff]
        %v1148 = vld [vmem:[%s1133 + $0x70] sm:$0xf]
        %v1149 = vmul.f32 %v1134, %v337
        %v1150 = vmul.f32 %v1135, %v337
        %v1151 = vmul.f32 %v1136, %v337
        %v1152 = vmul.f32 %v1137, %v337
        %v1153 = vmul.f32 %v1138, %v337
        %v1154 = vmul.f32 %v1139, %v337
        %v1155 = vmul.f32 %v1140, %v337
        %v1156 = vmul.f32 %v1141, %v337
        %v1157 = vmul.f32 %v1142, %v337
        %v1158 = vmul.f32 %v1137, %v350
        %v1159 = vmul.f32 %v1138, %v350
        %v1160 = vmul.f32 %v1139, %v350
        %v1161 = vmul.f32 %v1140, %v350
        %v1162 = vmul.f32 %v1141, %v350
        %v1163 = vmul.f32 %v1142, %v350
        %v1164 = vmul.f32 %v1143, %v350
        %v1165 = vmul.f32 %v1144, %v350
        %v1166 = vmul.f32 %v1145, %v350
        %v1167 = vadd.f32 %v1149, %v1158
        %v1168 = vadd.f32 %v1150, %v1159
        %v1169 = vadd.f32 %v1151, %v1160
        %v1170 = vadd.f32 %v1152, %v1161
        %v1171 = vadd.f32 %v1153, %v1162
        %v1172 = vadd.f32 %v1154, %v1163
        %v1173 = vadd.f32 %v1155, %v1164
        %v1174 = vadd.f32 %v1156, %v1165
        %v1175 = vadd.f32 %v1157, %v1166
        %v1176 = vmul.f32 %v1140, %v372
        %v1177 = vmul.f32 %v1141, %v372
        %v1178 = vmul.f32 %v1142, %v372
        %v1179 = vmul.f32 %v1143, %v372
        %v1180 = vmul.f32 %v1144, %v372
        %v1181 = vmul.f32 %v1145, %v372
        %v1182 = vmul.f32 %v1146, %v372
        %v1183 = vmul.f32 %v1147, %v372
        %v1184 = vmul.f32 %v1148, %v372
        %v1185 = vadd.f32 %v1167, %v1176
        %v1186 = vadd.f32 %v1168, %v1177
        %v1187 = vadd.f32 %v1169, %v1178
        %v1188 = vadd.f32 %v1170, %v1179
        %v1189 = vadd.f32 %v1171, %v1180
        %v1190 = vadd.f32 %v1172, %v1181
        %v1191 = vadd.f32 %v1173, %v1182
        %v1192 = vadd.f32 %v1174, %v1183
        %v1193 = vadd.f32 %v1175, %v1184
        %v1194 = vmul.f32 %v1134, %v394
        %v1195 = vmul.f32 %v1135, %v394
        %v1196 = vmul.f32 %v1136, %v394
        %v1197 = vmul.f32 %v1137, %v394
        %v1198 = vmul.f32 %v1138, %v394
        %v1199 = vmul.f32 %v1139, %v394
        %v1200 = vmul.f32 %v1140, %v394
        %v1201 = vmul.f32 %v1141, %v394
        %v1202 = vmul.f32 %v1142, %v394
        %v1212 = vrot.slane %v1194, 1
        %v1213 = vrot.slane %v1195, 1
        %v1214 = vsel %vm413, %v1212, %v1213
        %v1215 = vrot.slane %v1196, 1
        %v1216 = vsel %vm413, %v1213, %v1215
        %v1217 = vrot.slane %v1197, 1
        %v1218 = vrot.slane %v1198, 1
        %v1219 = vsel %vm413, %v1217, %v1218
        %v1220 = vrot.slane %v1199, 1
        %v1221 = vsel %vm413, %v1218, %v1220
        %v1222 = vrot.slane %v1200, 1
        %v1223 = vrot.slane %v1201, 1
        %v1224 = vsel %vm413, %v1222, %v1223
        %v1225 = vrot.slane %v1202, 1
        %v1226 = vsel %vm413, %v1223, %v1225
        %v1236 = vadd.f32 %v1185, %v1214
        %v1237 = vadd.f32 %v1186, %v1216
        %v1238 = vadd.f32 %v1187, %v1215
        %v1239 = vadd.f32 %v1188, %v1219
        %v1240 = vadd.f32 %v1189, %v1221
        %v1241 = vadd.f32 %v1190, %v1220
        %v1242 = vadd.f32 %v1191, %v1224
        %v1243 = vadd.f32 %v1192, %v1226
        %v1244 = vadd.f32 %v1193, %v1225
        %v1245 = vmul.f32 %v1137, %v450
        %v1246 = vmul.f32 %v1138, %v450
        %v1247 = vmul.f32 %v1139, %v450
        %v1248 = vmul.f32 %v1140, %v450
        %v1249 = vmul.f32 %v1141, %v450
        %v1250 = vmul.f32 %v1142, %v450
        %v1251 = vmul.f32 %v1143, %v450
        %v1252 = vmul.f32 %v1144, %v450
        %v1253 = vmul.f32 %v1145, %v450
        %v1263 = vrot.slane %v1245, 1
        %v1264 = vrot.slane %v1246, 1
        %v1265 = vsel %vm413, %v1263, %v1264
        %v1266 = vrot.slane %v1247, 1
        %v1267 = vsel %vm413, %v1264, %v1266
        %v1268 = vrot.slane %v1248, 1
        %v1269 = vrot.slane %v1249, 1
        %v1270 = vsel %vm413, %v1268, %v1269
        %v1271 = vrot.slane %v1250, 1
        %v1272 = vsel %vm413, %v1269, %v1271
        %v1273 = vrot.slane %v1251, 1
        %v1274 = vrot.slane %v1252, 1
        %v1275 = vsel %vm413, %v1273, %v1274
        %v1276 = vrot.slane %v1253, 1
        %v1277 = vsel %vm413, %v1274, %v1276
        %v1287 = vadd.f32 %v1236, %v1265
        %v1288 = vadd.f32 %v1237, %v1267
        %v1289 = vadd.f32 %v1238, %v1266
        %v1290 = vadd.f32 %v1239, %v1270
        %v1291 = vadd.f32 %v1240, %v1272
        %v1292 = vadd.f32 %v1241, %v1271
        %v1293 = vadd.f32 %v1242, %v1275
        %v1294 = vadd.f32 %v1243, %v1277
        %v1295 = vadd.f32 %v1244, %v1276
        %v1296 = vmul.f32 %v1140, %v505
        %v1297 = vmul.f32 %v1141, %v505
        %v1298 = vmul.f32 %v1142, %v505
        %v1299 = vmul.f32 %v1143, %v505
        %v1300 = vmul.f32 %v1144, %v505
        %v1301 = vmul.f32 %v1145, %v505
        %v1302 = vmul.f32 %v1146, %v505
        %v1303 = vmul.f32 %v1147, %v505
        %v1304 = vmul.f32 %v1148, %v505
        %v1314 = vrot.slane %v1296, 1
        %v1315 = vrot.slane %v1297, 1
        %v1316 = vsel %vm413, %v1314, %v1315
        %v1317 = vrot.slane %v1298, 1
        %v1318 = vsel %vm413, %v1315, %v1317
        %v1319 = vrot.slane %v1299, 1
        %v1320 = vrot.slane %v1300, 1
        %v1321 = vsel %vm413, %v1319, %v1320
        %v1322 = vrot.slane %v1301, 1
        %v1323 = vsel %vm413, %v1320, %v1322
        %v1324 = vrot.slane %v1302, 1
        %v1325 = vrot.slane %v1303, 1
        %v1326 = vsel %vm413, %v1324, %v1325
        %v1327 = vrot.slane %v1304, 1
        %v1328 = vsel %vm413, %v1325, %v1327
        %v1338 = vadd.f32 %v1287, %v1316
        %v1339 = vadd.f32 %v1288, %v1318
        %v1340 = vadd.f32 %v1289, %v1317
        %v1341 = vadd.f32 %v1290, %v1321
        %v1342 = vadd.f32 %v1291, %v1323
        %v1343 = vadd.f32 %v1292, %v1322
        %v1344 = vadd.f32 %v1293, %v1326
        %v1345 = vadd.f32 %v1294, %v1328
        %v1346 = vadd.f32 %v1295, %v1327
        %v1347 = vmul.f32 %v1134, %v560
        %v1348 = vmul.f32 %v1135, %v560
        %v1349 = vmul.f32 %v1136, %v560
        %v1350 = vmul.f32 %v1137, %v560
        %v1351 = vmul.f32 %v1138, %v560
        %v1352 = vmul.f32 %v1139, %v560
        %v1353 = vmul.f32 %v1140, %v560
        %v1354 = vmul.f32 %v1141, %v560
        %v1355 = vmul.f32 %v1142, %v560
        %v1365 = vrot.slane %v1347, 2
        %v1366 = vrot.slane %v1348, 2
        %v1367 = vsel %vm579, %v1365, %v1366
        %v1368 = vrot.slane %v1349, 2
        %v1369 = vsel %vm579, %v1366, %v1368
        %v1370 = vrot.slane %v1350, 2
        %v1371 = vrot.slane %v1351, 2
        %v1372 = vsel %vm579, %v1370, %v1371
        %v1373 = vrot.slane %v1352, 2
        %v1374 = vsel %vm579, %v1371, %v1373
        %v1375 = vrot.slane %v1353, 2
        %v1376 = vrot.slane %v1354, 2
        %v1377 = vsel %vm579, %v1375, %v1376
        %v1378 = vrot.slane %v1355, 2
        %v1379 = vsel %vm579, %v1376, %v1378
        %v1389 = vadd.f32 %v1338, %v1367
        %v1390 = vadd.f32 %v1339, %v1369
        %v1391 = vadd.f32 %v1340, %v1368
        %v1392 = vadd.f32 %v1341, %v1372
        %v1393 = vadd.f32 %v1342, %v1374
        %v1394 = vadd.f32 %v1343, %v1373
        %v1395 = vadd.f32 %v1344, %v1377
        %v1396 = vadd.f32 %v1345, %v1379
        %v1397 = vadd.f32 %v1346, %v1378
        %v1398 = vmul.f32 %v1137, %v616
        %v1399 = vmul.f32 %v1138, %v616
        %v1400 = vmul.f32 %v1139, %v616
        %v1401 = vmul.f32 %v1140, %v616
        %v1402 = vmul.f32 %v1141, %v616
        %v1403 = vmul.f32 %v1142, %v616
        %v1404 = vmul.f32 %v1143, %v616
        %v1405 = vmul.f32 %v1144, %v616
        %v1406 = vmul.f32 %v1145, %v616
        %v1416 = vrot.slane %v1398, 2
        %v1417 = vrot.slane %v1399, 2
        %v1418 = vsel %vm579, %v1416, %v1417
        %v1419 = vrot.slane %v1400, 2
        %v1420 = vsel %vm579, %v1417, %v1419
        %v1421 = vrot.slane %v1401, 2
        %v1422 = vrot.slane %v1402, 2
        %v1423 = vsel %vm579, %v1421, %v1422
        %v1424 = vrot.slane %v1403, 2
        %v1425 = vsel %vm579, %v1422, %v1424
        %v1426 = vrot.slane %v1404, 2
        %v1427 = vrot.slane %v1405, 2
        %v1428 = vsel %vm579, %v1426, %v1427
        %v1429 = vrot.slane %v1406, 2
        %v1430 = vsel %vm579, %v1427, %v1429
        %v1440 = vadd.f32 %v1389, %v1418
        %v1441 = vadd.f32 %v1390, %v1420
        %v1442 = vadd.f32 %v1391, %v1419
        %v1443 = vadd.f32 %v1392, %v1423
        %v1444 = vadd.f32 %v1393, %v1425
        %v1445 = vadd.f32 %v1394, %v1424
        %v1446 = vadd.f32 %v1395, %v1428
        %v1447 = vadd.f32 %v1396, %v1430
        %v1448 = vadd.f32 %v1397, %v1429
        %v1449 = vmul.f32 %v1140, %v671
        %v1450 = vmul.f32 %v1141, %v671
        %v1451 = vmul.f32 %v1142, %v671
        %v1452 = vmul.f32 %v1143, %v671
        %v1453 = vmul.f32 %v1144, %v671
        %v1454 = vmul.f32 %v1145, %v671
        %v1455 = vmul.f32 %v1146, %v671
        %v1456 = vmul.f32 %v1147, %v671
        %v1457 = vmul.f32 %v1148, %v671
        %v1467 = vrot.slane %v1449, 2
        %v1468 = vrot.slane %v1450, 2
        %v1469 = vsel %vm579, %v1467, %v1468
        %v1470 = vrot.slane %v1451, 2
        %v1471 = vsel %vm579, %v1468, %v1470
        %v1472 = vrot.slane %v1452, 2
        %v1473 = vrot.slane %v1453, 2
        %v1474 = vsel %vm579, %v1472, %v1473
        %v1475 = vrot.slane %v1454, 2
        %v1476 = vsel %vm579, %v1473, %v1475
        %v1477 = vrot.slane %v1455, 2
        %v1478 = vrot.slane %v1456, 2
        %v1479 = vsel %vm579, %v1477, %v1478
        %v1480 = vrot.slane %v1457, 2
        %v1481 = vsel %vm579, %v1478, %v1480
        %v1491 = vadd.f32 %v1440, %v1469
        %v1492 = vadd.f32 %v1441, %v1471
        %v1493 = vadd.f32 %v1442, %v1470
        %v1494 = vadd.f32 %v1443, %v1474
        %v1495 = vadd.f32 %v1444, %v1476
        %v1496 = vadd.f32 %v1445, %v1475
        %v1497 = vadd.f32 %v1446, %v1479
        %v1498 = vadd.f32 %v1447, %v1481
        %v1499 = vadd.f32 %v1448, %v1480
        %v1500 = vadd.f32 %v1491, %v727
        %v1501 = vadd.f32 %v1492, %v727
        %v1502 = vadd.f32 %v1493, %v727
        %v1503 = vadd.f32 %v1494, %v727
        %v1504 = vadd.f32 %v1495, %v727
        %v1505 = vadd.f32 %v1496, %v727
        %v1506 = vadd.f32 %v1497, %v727
        %v1507 = vadd.f32 %v1498, %v727
        %v1508 = vadd.f32 %v1499, %v727
        %s1509 = scalar_lea.vmem %s205, 144
        %1510 = vst [vmem:[%s1509] sm:$0xff] %v1500
        %1511 = vst [vmem:[%s1509 + $0x8] sm:$0xff] %v1501
        %1512 = vst [vmem:[%s1509 + $0x10] sm:$0x3] %v1502
        %1513 = vst [vmem:[%s1509 + $0x18] sm:$0xff] %v1503
        %1514 = vst [vmem:[%s1509 + $0x20] sm:$0xff] %v1504
        %1515 = vst [vmem:[%s1509 + $0x28] sm:$0x3] %v1505
        %1516 = vst [vmem:[%s1509 + $0x30] sm:$0xff] %v1506
        %1517 = vst [vmem:[%s1509 + $0x38] sm:$0xff] %v1507
        %1518 = vst [vmem:[%s1509 + $0x40] sm:$0x3] %v1508
        %s1519 = scalar_lea.vmem [#allocation2], 216
        %v1520 = vld [vmem:[%s1519] sm:$0xff]
        %v1521 = vld [vmem:[%s1519 + $0x8] sm:$0xff]
        %v1522 = vld [vmem:[%s1519 + $0x10] sm:$0xf]
        %v1523 = vld [vmem:[%s1519 + $0x18] sm:$0xff]
        %v1524 = vld [vmem:[%s1519 + $0x20] sm:$0xff]
        %v1525 = vld [vmem:[%s1519 + $0x28] sm:$0xf]
        %v1526 = vld [vmem:[%s1519 + $0x30] sm:$0xff]
        %v1527 = vld [vmem:[%s1519 + $0x38] sm:$0xff]
        %v1528 = vld [vmem:[%s1519 + $0x40] sm:$0xf]
        %v1529 = vld [vmem:[%s1519 + $0x48] sm:$0xff]
        %v1530 = vld [vmem:[%s1519 + $0x50] sm:$0xff]
        %v1531 = vld [vmem:[%s1519 + $0x58] sm:$0xf]
        %v1532 = vld [vmem:[%s1519 + $0x60] sm:$0xff]
        %v1533 = vld [vmem:[%s1519 + $0x68] sm:$0xff]
        %v1534 = vld [vmem:[%s1519 + $0x70] sm:$0xf]
        %v1535 = vmul.f32 %v1520, %v337
        %v1536 = vmul.f32 %v1521, %v337
        %v1537 = vmul.f32 %v1522, %v337
        %v1538 = vmul.f32 %v1523, %v337
        %v1539 = vmul.f32 %v1524, %v337
        %v1540 = vmul.f32 %v1525, %v337
        %v1541 = vmul.f32 %v1526, %v337
        %v1542 = vmul.f32 %v1527, %v337
        %v1543 = vmul.f32 %v1528, %v337
        %v1544 = vmul.f32 %v1523, %v350
        %v1545 = vmul.f32 %v1524, %v350
        %v1546 = vmul.f32 %v1525, %v350
        %v1547 = vmul.f32 %v1526, %v350
        %v1548 = vmul.f32 %v1527, %v350
        %v1549 = vmul.f32 %v1528, %v350
        %v1550 = vmul.f32 %v1529, %v350
        %v1551 = vmul.f32 %v1530, %v350
        %v1552 = vmul.f32 %v1531, %v350
        %v1553 = vadd.f32 %v1535, %v1544
        %v1554 = vadd.f32 %v1536, %v1545
        %v1555 = vadd.f32 %v1537, %v1546
        %v1556 = vadd.f32 %v1538, %v1547
        %v1557 = vadd.f32 %v1539, %v1548
        %v1558 = vadd.f32 %v1540, %v1549
        %v1559 = vadd.f32 %v1541, %v1550
        %v1560 = vadd.f32 %v1542, %v1551
        %v1561 = vadd.f32 %v1543, %v1552
        %v1562 = vmul.f32 %v1526, %v372
        %v1563 = vmul.f32 %v1527, %v372
        %v1564 = vmul.f32 %v1528, %v372
        %v1565 = vmul.f32 %v1529, %v372
        %v1566 = vmul.f32 %v1530, %v372
        %v1567 = vmul.f32 %v1531, %v372
        %v1568 = vmul.f32 %v1532, %v372
        %v1569 = vmul.f32 %v1533, %v372
        %v1570 = vmul.f32 %v1534, %v372
        %v1571 = vadd.f32 %v1553, %v1562
        %v1572 = vadd.f32 %v1554, %v1563
        %v1573 = vadd.f32 %v1555, %v1564
        %v1574 = vadd.f32 %v1556, %v1565
        %v1575 = vadd.f32 %v1557, %v1566
        %v1576 = vadd.f32 %v1558, %v1567
        %v1577 = vadd.f32 %v1559, %v1568
        %v1578 = vadd.f32 %v1560, %v1569
        %v1579 = vadd.f32 %v1561, %v1570
        %v1580 = vmul.f32 %v1520, %v394
        %v1581 = vmul.f32 %v1521, %v394
        %v1582 = vmul.f32 %v1522, %v394
        %v1583 = vmul.f32 %v1523, %v394
        %v1584 = vmul.f32 %v1524, %v394
        %v1585 = vmul.f32 %v1525, %v394
        %v1586 = vmul.f32 %v1526, %v394
        %v1587 = vmul.f32 %v1527, %v394
        %v1588 = vmul.f32 %v1528, %v394
        %v1598 = vrot.slane %v1580, 1
        %v1599 = vrot.slane %v1581, 1
        %v1600 = vsel %vm413, %v1598, %v1599
        %v1601 = vrot.slane %v1582, 1
        %v1602 = vsel %vm413, %v1599, %v1601
        %v1603 = vrot.slane %v1583, 1
        %v1604 = vrot.slane %v1584, 1
        %v1605 = vsel %vm413, %v1603, %v1604
        %v1606 = vrot.slane %v1585, 1
        %v1607 = vsel %vm413, %v1604, %v1606
        %v1608 = vrot.slane %v1586, 1
        %v1609 = vrot.slane %v1587, 1
        %v1610 = vsel %vm413, %v1608, %v1609
        %v1611 = vrot.slane %v1588, 1
        %v1612 = vsel %vm413, %v1609, %v1611
        %v1622 = vadd.f32 %v1571, %v1600
        %v1623 = vadd.f32 %v1572, %v1602
        %v1624 = vadd.f32 %v1573, %v1601
        %v1625 = vadd.f32 %v1574, %v1605
        %v1626 = vadd.f32 %v1575, %v1607
        %v1627 = vadd.f32 %v1576, %v1606
        %v1628 = vadd.f32 %v1577, %v1610
        %v1629 = vadd.f32 %v1578, %v1612
        %v1630 = vadd.f32 %v1579, %v1611
        %v1631 = vmul.f32 %v1523, %v450
        %v1632 = vmul.f32 %v1524, %v450
        %v1633 = vmul.f32 %v1525, %v450
        %v1634 = vmul.f32 %v1526, %v450
        %v1635 = vmul.f32 %v1527, %v450
        %v1636 = vmul.f32 %v1528, %v450
        %v1637 = vmul.f32 %v1529, %v450
        %v1638 = vmul.f32 %v1530, %v450
        %v1639 = vmul.f32 %v1531, %v450
        %v1649 = vrot.slane %v1631, 1
        %v1650 = vrot.slane %v1632, 1
        %v1651 = vsel %vm413, %v1649, %v1650
        %v1652 = vrot.slane %v1633, 1
        %v1653 = vsel %vm413, %v1650, %v1652
        %v1654 = vrot.slane %v1634, 1
        %v1655 = vrot.slane %v1635, 1
        %v1656 = vsel %vm413, %v1654, %v1655
        %v1657 = vrot.slane %v1636, 1
        %v1658 = vsel %vm413, %v1655, %v1657
        %v1659 = vrot.slane %v1637, 1
        %v1660 = vrot.slane %v1638, 1
        %v1661 = vsel %vm413, %v1659, %v1660
        %v1662 = vrot.slane %v1639, 1
        %v1663 = vsel %vm413, %v1660, %v1662
        %v1673 = vadd.f32 %v1622, %v1651
        %v1674 = vadd.f32 %v1623, %v1653
        %v1675 = vadd.f32 %v1624, %v1652
        %v1676 = vadd.f32 %v1625, %v1656
        %v1677 = vadd.f32 %v1626, %v1658
        %v1678 = vadd.f32 %v1627, %v1657
        %v1679 = vadd.f32 %v1628, %v1661
        %v1680 = vadd.f32 %v1629, %v1663
        %v1681 = vadd.f32 %v1630, %v1662
        %v1682 = vmul.f32 %v1526, %v505
        %v1683 = vmul.f32 %v1527, %v505
        %v1684 = vmul.f32 %v1528, %v505
        %v1685 = vmul.f32 %v1529, %v505
        %v1686 = vmul.f32 %v1530, %v505
        %v1687 = vmul.f32 %v1531, %v505
        %v1688 = vmul.f32 %v1532, %v505
        %v1689 = vmul.f32 %v1533, %v505
        %v1690 = vmul.f32 %v1534, %v505
        %v1700 = vrot.slane %v1682, 1
        %v1701 = vrot.slane %v1683, 1
        %v1702 = vsel %vm413, %v1700, %v1701
        %v1703 = vrot.slane %v1684, 1
        %v1704 = vsel %vm413, %v1701, %v1703
        %v1705 = vrot.slane %v1685, 1
        %v1706 = vrot.slane %v1686, 1
        %v1707 = vsel %vm413, %v1705, %v1706
        %v1708 = vrot.slane %v1687, 1
        %v1709 = vsel %vm413, %v1706, %v1708
        %v1710 = vrot.slane %v1688, 1
        %v1711 = vrot.slane %v1689, 1
        %v1712 = vsel %vm413, %v1710, %v1711
        %v1713 = vrot.slane %v1690, 1
        %v1714 = vsel %vm413, %v1711, %v1713
        %v1724 = vadd.f32 %v1673, %v1702
        %v1725 = vadd.f32 %v1674, %v1704
        %v1726 = vadd.f32 %v1675, %v1703
        %v1727 = vadd.f32 %v1676, %v1707
        %v1728 = vadd.f32 %v1677, %v1709
        %v1729 = vadd.f32 %v1678, %v1708
        %v1730 = vadd.f32 %v1679, %v1712
        %v1731 = vadd.f32 %v1680, %v1714
        %v1732 = vadd.f32 %v1681, %v1713
        %v1733 = vmul.f32 %v1520, %v560
        %v1734 = vmul.f32 %v1521, %v560
        %v1735 = vmul.f32 %v1522, %v560
        %v1736 = vmul.f32 %v1523, %v560
        %v1737 = vmul.f32 %v1524, %v560
        %v1738 = vmul.f32 %v1525, %v560
        %v1739 = vmul.f32 %v1526, %v560
        %v1740 = vmul.f32 %v1527, %v560
        %v1741 = vmul.f32 %v1528, %v560
        %v1751 = vrot.slane %v1733, 2
        %v1752 = vrot.slane %v1734, 2
        %v1753 = vsel %vm579, %v1751, %v1752
        %v1754 = vrot.slane %v1735, 2
        %v1755 = vsel %vm579, %v1752, %v1754
        %v1756 = vrot.slane %v1736, 2
        %v1757 = vrot.slane %v1737, 2
        %v1758 = vsel %vm579, %v1756, %v1757
        %v1759 = vrot.slane %v1738, 2
        %v1760 = vsel %vm579, %v1757, %v1759
        %v1761 = vrot.slane %v1739, 2
        %v1762 = vrot.slane %v1740, 2
        %v1763 = vsel %vm579, %v1761, %v1762
        %v1764 = vrot.slane %v1741, 2
        %v1765 = vsel %vm579, %v1762, %v1764
        %v1775 = vadd.f32 %v1724, %v1753
        %v1776 = vadd.f32 %v1725, %v1755
        %v1777 = vadd.f32 %v1726, %v1754
        %v1778 = vadd.f32 %v1727, %v1758
        %v1779 = vadd.f32 %v1728, %v1760
        %v1780 = vadd.f32 %v1729, %v1759
        %v1781 = vadd.f32 %v1730, %v1763
        %v1782 = vadd.f32 %v1731, %v1765
        %v1783 = vadd.f32 %v1732, %v1764
        %v1784 = vmul.f32 %v1523, %v616
        %v1785 = vmul.f32 %v1524, %v616
        %v1786 = vmul.f32 %v1525, %v616
        %v1787 = vmul.f32 %v1526, %v616
        %v1788 = vmul.f32 %v1527, %v616
        %v1789 = vmul.f32 %v1528, %v616
        %v1790 = vmul.f32 %v1529, %v616
        %v1791 = vmul.f32 %v1530, %v616
        %v1792 = vmul.f32 %v1531, %v616
        %v1802 = vrot.slane %v1784, 2
        %v1803 = vrot.slane %v1785, 2
        %v1804 = vsel %vm579, %v1802, %v1803
        %v1805 = vrot.slane %v1786, 2
        %v1806 = vsel %vm579, %v1803, %v1805
        %v1807 = vrot.slane %v1787, 2
        %v1808 = vrot.slane %v1788, 2
        %v1809 = vsel %vm579, %v1807, %v1808
        %v1810 = vrot.slane %v1789, 2
        %v1811 = vsel %vm579, %v1808, %v1810
        %v1812 = vrot.slane %v1790, 2
        %v1813 = vrot.slane %v1791, 2
        %v1814 = vsel %vm579, %v1812, %v1813
        %v1815 = vrot.slane %v1792, 2
        %v1816 = vsel %vm579, %v1813, %v1815
        %v1826 = vadd.f32 %v1775, %v1804
        %v1827 = vadd.f32 %v1776, %v1806
        %v1828 = vadd.f32 %v1777, %v1805
        %v1829 = vadd.f32 %v1778, %v1809
        %v1830 = vadd.f32 %v1779, %v1811
        %v1831 = vadd.f32 %v1780, %v1810
        %v1832 = vadd.f32 %v1781, %v1814
        %v1833 = vadd.f32 %v1782, %v1816
        %v1834 = vadd.f32 %v1783, %v1815
        %v1835 = vmul.f32 %v1526, %v671
        %v1836 = vmul.f32 %v1527, %v671
        %v1837 = vmul.f32 %v1528, %v671
        %v1838 = vmul.f32 %v1529, %v671
        %v1839 = vmul.f32 %v1530, %v671
        %v1840 = vmul.f32 %v1531, %v671
        %v1841 = vmul.f32 %v1532, %v671
        %v1842 = vmul.f32 %v1533, %v671
        %v1843 = vmul.f32 %v1534, %v671
        %v1853 = vrot.slane %v1835, 2
        %v1854 = vrot.slane %v1836, 2
        %v1855 = vsel %vm579, %v1853, %v1854
        %v1856 = vrot.slane %v1837, 2
        %v1857 = vsel %vm579, %v1854, %v1856
        %v1858 = vrot.slane %v1838, 2
        %v1859 = vrot.slane %v1839, 2
        %v1860 = vsel %vm579, %v1858, %v1859
        %v1861 = vrot.slane %v1840, 2
        %v1862 = vsel %vm579, %v1859, %v1861
        %v1863 = vrot.slane %v1841, 2
        %v1864 = vrot.slane %v1842, 2
        %v1865 = vsel %vm579, %v1863, %v1864
        %v1866 = vrot.slane %v1843, 2
        %v1867 = vsel %vm579, %v1864, %v1866
        %v1877 = vadd.f32 %v1826, %v1855
        %v1878 = vadd.f32 %v1827, %v1857
        %v1879 = vadd.f32 %v1828, %v1856
        %v1880 = vadd.f32 %v1829, %v1860
        %v1881 = vadd.f32 %v1830, %v1862
        %v1882 = vadd.f32 %v1831, %v1861
        %v1883 = vadd.f32 %v1832, %v1865
        %v1884 = vadd.f32 %v1833, %v1867
        %v1885 = vadd.f32 %v1834, %v1866
        %v1886 = vadd.f32 %v1877, %v727
        %v1887 = vadd.f32 %v1878, %v727
        %v1888 = vadd.f32 %v1879, %v727
        %v1889 = vadd.f32 %v1880, %v727
        %v1890 = vadd.f32 %v1881, %v727
        %v1891 = vadd.f32 %v1882, %v727
        %v1892 = vadd.f32 %v1883, %v727
        %v1893 = vadd.f32 %v1884, %v727
        %v1894 = vadd.f32 %v1885, %v727
        %s1895 = scalar_lea.vmem %s205, 216
        %1896 = vst [vmem:[%s1895] sm:$0xff] %v1886
        %1897 = vst [vmem:[%s1895 + $0x8] sm:$0xff] %v1887
        %1898 = vst [vmem:[%s1895 + $0x10] sm:$0x3] %v1888
        %1899 = vst [vmem:[%s1895 + $0x18] sm:$0xff] %v1889
        %1900 = vst [vmem:[%s1895 + $0x20] sm:$0xff] %v1890
        %1901 = vst [vmem:[%s1895 + $0x28] sm:$0x3] %v1891
        %1902 = vst [vmem:[%s1895 + $0x30] sm:$0xff] %v1892
        %1903 = vst [vmem:[%s1895 + $0x38] sm:$0xff] %v1893
        %1904 = vst [vmem:[%s1895 + $0x40] sm:$0x3] %v1894
        %s1905 = scalar_lea.vmem [#allocation2], 288
        %v1906 = vld [vmem:[%s1905] sm:$0xff]
        %v1907 = vld [vmem:[%s1905 + $0x8] sm:$0xff]
        %v1908 = vld [vmem:[%s1905 + $0x10] sm:$0xf]
        %v1909 = vld [vmem:[%s1905 + $0x18] sm:$0xff]
        %v1910 = vld [vmem:[%s1905 + $0x20] sm:$0xff]
        %v1911 = vld [vmem:[%s1905 + $0x28] sm:$0xf]
        %v1912 = vld [vmem:[%s1905 + $0x30] sm:$0xff]
        %v1913 = vld [vmem:[%s1905 + $0x38] sm:$0xff]
        %v1914 = vld [vmem:[%s1905 + $0x40] sm:$0xf]
        %v1915 = vld [vmem:[%s1905 + $0x48] sm:$0xff]
        %v1916 = vld [vmem:[%s1905 + $0x50] sm:$0xff]
        %v1917 = vld [vmem:[%s1905 + $0x58] sm:$0xf]
        %v1918 = vld [vmem:[%s1905 + $0x60] sm:$0xff]
        %v1919 = vld [vmem:[%s1905 + $0x68] sm:$0xff]
        %v1920 = vld [vmem:[%s1905 + $0x70] sm:$0xf]
        %v1921 = vmul.f32 %v1906, %v337
        %v1922 = vmul.f32 %v1907, %v337
        %v1923 = vmul.f32 %v1908, %v337
        %v1924 = vmul.f32 %v1909, %v337
        %v1925 = vmul.f32 %v1910, %v337
        %v1926 = vmul.f32 %v1911, %v337
        %v1927 = vmul.f32 %v1912, %v337
        %v1928 = vmul.f32 %v1913, %v337
        %v1929 = vmul.f32 %v1914, %v337
        %v1930 = vmul.f32 %v1909, %v350
        %v1931 = vmul.f32 %v1910, %v350
        %v1932 = vmul.f32 %v1911, %v350
        %v1933 = vmul.f32 %v1912, %v350
        %v1934 = vmul.f32 %v1913, %v350
        %v1935 = vmul.f32 %v1914, %v350
        %v1936 = vmul.f32 %v1915, %v350
        %v1937 = vmul.f32 %v1916, %v350
        %v1938 = vmul.f32 %v1917, %v350
        %v1939 = vadd.f32 %v1921, %v1930
        %v1940 = vadd.f32 %v1922, %v1931
        %v1941 = vadd.f32 %v1923, %v1932
        %v1942 = vadd.f32 %v1924, %v1933
        %v1943 = vadd.f32 %v1925, %v1934
        %v1944 = vadd.f32 %v1926, %v1935
        %v1945 = vadd.f32 %v1927, %v1936
        %v1946 = vadd.f32 %v1928, %v1937
        %v1947 = vadd.f32 %v1929, %v1938
        %v1948 = vmul.f32 %v1912, %v372
        %v1949 = vmul.f32 %v1913, %v372
        %v1950 = vmul.f32 %v1914, %v372
        %v1951 = vmul.f32 %v1915, %v372
        %v1952 = vmul.f32 %v1916, %v372
        %v1953 = vmul.f32 %v1917, %v372
        %v1954 = vmul.f32 %v1918, %v372
        %v1955 = vmul.f32 %v1919, %v372
        %v1956 = vmul.f32 %v1920, %v372
        %v1957 = vadd.f32 %v1939, %v1948
        %v1958 = vadd.f32 %v1940, %v1949
        %v1959 = vadd.f32 %v1941, %v1950
        %v1960 = vadd.f32 %v1942, %v1951
        %v1961 = vadd.f32 %v1943, %v1952
        %v1962 = vadd.f32 %v1944, %v1953
        %v1963 = vadd.f32 %v1945, %v1954
        %v1964 = vadd.f32 %v1946, %v1955
        %v1965 = vadd.f32 %v1947, %v1956
        %v1966 = vmul.f32 %v1906, %v394
        %v1967 = vmul.f32 %v1907, %v394
        %v1968 = vmul.f32 %v1908, %v394
        %v1969 = vmul.f32 %v1909, %v394
        %v1970 = vmul.f32 %v1910, %v394
        %v1971 = vmul.f32 %v1911, %v394
        %v1972 = vmul.f32 %v1912, %v394
        %v1973 = vmul.f32 %v1913, %v394
        %v1974 = vmul.f32 %v1914, %v394
        %v1984 = vrot.slane %v1966, 1
        %v1985 = vrot.slane %v1967, 1
        %v1986 = vsel %vm413, %v1984, %v1985
        %v1987 = vrot.slane %v1968, 1
        %v1988 = vsel %vm413, %v1985, %v1987
        %v1989 = vrot.slane %v1969, 1
        %v1990 = vrot.slane %v1970, 1
        %v1991 = vsel %vm413, %v1989, %v1990
        %v1992 = vrot.slane %v1971, 1
        %v1993 = vsel %vm413, %v1990, %v1992
        %v1994 = vrot.slane %v1972, 1
        %v1995 = vrot.slane %v1973, 1
        %v1996 = vsel %vm413, %v1994, %v1995
        %v1997 = vrot.slane %v1974, 1
        %v1998 = vsel %vm413, %v1995, %v1997
        %v2008 = vadd.f32 %v1957, %v1986
        %v2009 = vadd.f32 %v1958, %v1988
        %v2010 = vadd.f32 %v1959, %v1987
        %v2011 = vadd.f32 %v1960, %v1991
        %v2012 = vadd.f32 %v1961, %v1993
        %v2013 = vadd.f32 %v1962, %v1992
        %v2014 = vadd.f32 %v1963, %v1996
        %v2015 = vadd.f32 %v1964, %v1998
        %v2016 = vadd.f32 %v1965, %v1997
        %v2017 = vmul.f32 %v1909, %v450
        %v2018 = vmul.f32 %v1910, %v450
        %v2019 = vmul.f32 %v1911, %v450
        %v2020 = vmul.f32 %v1912, %v450
        %v2021 = vmul.f32 %v1913, %v450
        %v2022 = vmul.f32 %v1914, %v450
        %v2023 = vmul.f32 %v1915, %v450
        %v2024 = vmul.f32 %v1916, %v450
        %v2025 = vmul.f32 %v1917, %v450
        %v2035 = vrot.slane %v2017, 1
        %v2036 = vrot.slane %v2018, 1
        %v2037 = vsel %vm413, %v2035, %v2036
        %v2038 = vrot.slane %v2019, 1
        %v2039 = vsel %vm413, %v2036, %v2038
        %v2040 = vrot.slane %v2020, 1
        %v2041 = vrot.slane %v2021, 1
        %v2042 = vsel %vm413, %v2040, %v2041
        %v2043 = vrot.slane %v2022, 1
        %v2044 = vsel %vm413, %v2041, %v2043
        %v2045 = vrot.slane %v2023, 1
        %v2046 = vrot.slane %v2024, 1
        %v2047 = vsel %vm413, %v2045, %v2046
        %v2048 = vrot.slane %v2025, 1
        %v2049 = vsel %vm413, %v2046, %v2048
        %v2059 = vadd.f32 %v2008, %v2037
        %v2060 = vadd.f32 %v2009, %v2039
        %v2061 = vadd.f32 %v2010, %v2038
        %v2062 = vadd.f32 %v2011, %v2042
        %v2063 = vadd.f32 %v2012, %v2044
        %v2064 = vadd.f32 %v2013, %v2043
        %v2065 = vadd.f32 %v2014, %v2047
        %v2066 = vadd.f32 %v2015, %v2049
        %v2067 = vadd.f32 %v2016, %v2048
        %v2068 = vmul.f32 %v1912, %v505
        %v2069 = vmul.f32 %v1913, %v505
        %v2070 = vmul.f32 %v1914, %v505
        %v2071 = vmul.f32 %v1915, %v505
        %v2072 = vmul.f32 %v1916, %v505
        %v2073 = vmul.f32 %v1917, %v505
        %v2074 = vmul.f32 %v1918, %v505
        %v2075 = vmul.f32 %v1919, %v505
        %v2076 = vmul.f32 %v1920, %v505
        %v2086 = vrot.slane %v2068, 1
        %v2087 = vrot.slane %v2069, 1
        %v2088 = vsel %vm413, %v2086, %v2087
        %v2089 = vrot.slane %v2070, 1
        %v2090 = vsel %vm413, %v2087, %v2089
        %v2091 = vrot.slane %v2071, 1
        %v2092 = vrot.slane %v2072, 1
        %v2093 = vsel %vm413, %v2091, %v2092
        %v2094 = vrot.slane %v2073, 1
        %v2095 = vsel %vm413, %v2092, %v2094
        %v2096 = vrot.slane %v2074, 1
        %v2097 = vrot.slane %v2075, 1
        %v2098 = vsel %vm413, %v2096, %v2097
        %v2099 = vrot.slane %v2076, 1
        %v2100 = vsel %vm413, %v2097, %v2099
        %v2110 = vadd.f32 %v2059, %v2088
        %v2111 = vadd.f32 %v2060, %v2090
        %v2112 = vadd.f32 %v2061, %v2089
        %v2113 = vadd.f32 %v2062, %v2093
        %v2114 = vadd.f32 %v2063, %v2095
        %v2115 = vadd.f32 %v2064, %v2094
        %v2116 = vadd.f32 %v2065, %v2098
        %v2117 = vadd.f32 %v2066, %v2100
        %v2118 = vadd.f32 %v2067, %v2099
        %v2119 = vmul.f32 %v1906, %v560
        %v2120 = vmul.f32 %v1907, %v560
        %v2121 = vmul.f32 %v1908, %v560
        %v2122 = vmul.f32 %v1909, %v560
        %v2123 = vmul.f32 %v1910, %v560
        %v2124 = vmul.f32 %v1911, %v560
        %v2125 = vmul.f32 %v1912, %v560
        %v2126 = vmul.f32 %v1913, %v560
        %v2127 = vmul.f32 %v1914, %v560
        %v2137 = vrot.slane %v2119, 2
        %v2138 = vrot.slane %v2120, 2
        %v2139 = vsel %vm579, %v2137, %v2138
        %v2140 = vrot.slane %v2121, 2
        %v2141 = vsel %vm579, %v2138, %v2140
        %v2142 = vrot.slane %v2122, 2
        %v2143 = vrot.slane %v2123, 2
        %v2144 = vsel %vm579, %v2142, %v2143
        %v2145 = vrot.slane %v2124, 2
        %v2146 = vsel %vm579, %v2143, %v2145
        %v2147 = vrot.slane %v2125, 2
        %v2148 = vrot.slane %v2126, 2
        %v2149 = vsel %vm579, %v2147, %v2148
        %v2150 = vrot.slane %v2127, 2
        %v2151 = vsel %vm579, %v2148, %v2150
        %v2161 = vadd.f32 %v2110, %v2139
        %v2162 = vadd.f32 %v2111, %v2141
        %v2163 = vadd.f32 %v2112, %v2140
        %v2164 = vadd.f32 %v2113, %v2144
        %v2165 = vadd.f32 %v2114, %v2146
        %v2166 = vadd.f32 %v2115, %v2145
        %v2167 = vadd.f32 %v2116, %v2149
        %v2168 = vadd.f32 %v2117, %v2151
        %v2169 = vadd.f32 %v2118, %v2150
        %v2170 = vmul.f32 %v1909, %v616
        %v2171 = vmul.f32 %v1910, %v616
        %v2172 = vmul.f32 %v1911, %v616
        %v2173 = vmul.f32 %v1912, %v616
        %v2174 = vmul.f32 %v1913, %v616
        %v2175 = vmul.f32 %v1914, %v616
        %v2176 = vmul.f32 %v1915, %v616
        %v2177 = vmul.f32 %v1916, %v616
        %v2178 = vmul.f32 %v1917, %v616
        %v2188 = vrot.slane %v2170, 2
        %v2189 = vrot.slane %v2171, 2
        %v2190 = vsel %vm579, %v2188, %v2189
        %v2191 = vrot.slane %v2172, 2
        %v2192 = vsel %vm579, %v2189, %v2191
        %v2193 = vrot.slane %v2173, 2
        %v2194 = vrot.slane %v2174, 2
        %v2195 = vsel %vm579, %v2193, %v2194
        %v2196 = vrot.slane %v2175, 2
        %v2197 = vsel %vm579, %v2194, %v2196
        %v2198 = vrot.slane %v2176, 2
        %v2199 = vrot.slane %v2177, 2
        %v2200 = vsel %vm579, %v2198, %v2199
        %v2201 = vrot.slane %v2178, 2
        %v2202 = vsel %vm579, %v2199, %v2201
        %v2212 = vadd.f32 %v2161, %v2190
        %v2213 = vadd.f32 %v2162, %v2192
        %v2214 = vadd.f32 %v2163, %v2191
        %v2215 = vadd.f32 %v2164, %v2195
        %v2216 = vadd.f32 %v2165, %v2197
        %v2217 = vadd.f32 %v2166, %v2196
        %v2218 = vadd.f32 %v2167, %v2200
        %v2219 = vadd.f32 %v2168, %v2202
        %v2220 = vadd.f32 %v2169, %v2201
        %v2221 = vmul.f32 %v1912, %v671
        %v2222 = vmul.f32 %v1913, %v671
        %v2223 = vmul.f32 %v1914, %v671
        %v2224 = vmul.f32 %v1915, %v671
        %v2225 = vmul.f32 %v1916, %v671
        %v2226 = vmul.f32 %v1917, %v671
        %v2227 = vmul.f32 %v1918, %v671
        %v2228 = vmul.f32 %v1919, %v671
        %v2229 = vmul.f32 %v1920, %v671
        %v2239 = vrot.slane %v2221, 2
        %v2240 = vrot.slane %v2222, 2
        %v2241 = vsel %vm579, %v2239, %v2240
        %v2242 = vrot.slane %v2223, 2
        %v2243 = vsel %vm579, %v2240, %v2242
        %v2244 = vrot.slane %v2224, 2
        %v2245 = vrot.slane %v2225, 2
        %v2246 = vsel %vm579, %v2244, %v2245
        %v2247 = vrot.slane %v2226, 2
        %v2248 = vsel %vm579, %v2245, %v2247
        %v2249 = vrot.slane %v2227, 2
        %v2250 = vrot.slane %v2228, 2
        %v2251 = vsel %vm579, %v2249, %v2250
        %v2252 = vrot.slane %v2229, 2
        %v2253 = vsel %vm579, %v2250, %v2252
        %v2263 = vadd.f32 %v2212, %v2241
        %v2264 = vadd.f32 %v2213, %v2243
        %v2265 = vadd.f32 %v2214, %v2242
        %v2266 = vadd.f32 %v2215, %v2246
        %v2267 = vadd.f32 %v2216, %v2248
        %v2268 = vadd.f32 %v2217, %v2247
        %v2269 = vadd.f32 %v2218, %v2251
        %v2270 = vadd.f32 %v2219, %v2253
        %v2271 = vadd.f32 %v2220, %v2252
        %v2272 = vadd.f32 %v2263, %v727
        %v2273 = vadd.f32 %v2264, %v727
        %v2274 = vadd.f32 %v2265, %v727
        %v2275 = vadd.f32 %v2266, %v727
        %v2276 = vadd.f32 %v2267, %v727
        %v2277 = vadd.f32 %v2268, %v727
        %v2278 = vadd.f32 %v2269, %v727
        %v2279 = vadd.f32 %v2270, %v727
        %v2280 = vadd.f32 %v2271, %v727
        %s2281 = scalar_lea.vmem %s205, 288
        %2282 = vst [vmem:[%s2281] sm:$0xff] %v2272
        %2283 = vst [vmem:[%s2281 + $0x8] sm:$0xff] %v2273
        %2284 = vst [vmem:[%s2281 + $0x10] sm:$0x3] %v2274
        %2285 = vst [vmem:[%s2281 + $0x18] sm:$0xff] %v2275
        %2286 = vst [vmem:[%s2281 + $0x20] sm:$0xff] %v2276
        %2287 = vst [vmem:[%s2281 + $0x28] sm:$0x3] %v2277
        %2288 = vst [vmem:[%s2281 + $0x30] sm:$0xff] %v2278
        %2289 = vst [vmem:[%s2281 + $0x38] sm:$0xff] %v2279
        %2290 = vst [vmem:[%s2281 + $0x40] sm:$0x3] %v2280
        %s2291 = scalar_lea.vmem [#allocation2], 360
        %v2292 = vld [vmem:[%s2291] sm:$0xff]
        %v2293 = vld [vmem:[%s2291 + $0x8] sm:$0xff]
        %v2294 = vld [vmem:[%s2291 + $0x10] sm:$0xf]
        %v2295 = vld [vmem:[%s2291 + $0x18] sm:$0xff]
        %v2296 = vld [vmem:[%s2291 + $0x20] sm:$0xff]
        %v2297 = vld [vmem:[%s2291 + $0x28] sm:$0xf]
        %v2298 = vld [vmem:[%s2291 + $0x30] sm:$0xff]
        %v2299 = vld [vmem:[%s2291 + $0x38] sm:$0xff]
        %v2300 = vld [vmem:[%s2291 + $0x40] sm:$0xf]
        %v2301 = vld [vmem:[%s2291 + $0x48] sm:$0xff]
        %v2302 = vld [vmem:[%s2291 + $0x50] sm:$0xff]
        %v2303 = vld [vmem:[%s2291 + $0x58] sm:$0xf]
        %v2304 = vld [vmem:[%s2291 + $0x60] sm:$0xff]
        %v2305 = vld [vmem:[%s2291 + $0x68] sm:$0xff]
        %v2306 = vld [vmem:[%s2291 + $0x70] sm:$0xf]
        %v2307 = vmul.f32 %v2292, %v337
        %v2308 = vmul.f32 %v2293, %v337
        %v2309 = vmul.f32 %v2294, %v337
        %v2310 = vmul.f32 %v2295, %v337
        %v2311 = vmul.f32 %v2296, %v337
        %v2312 = vmul.f32 %v2297, %v337
        %v2313 = vmul.f32 %v2298, %v337
        %v2314 = vmul.f32 %v2299, %v337
        %v2315 = vmul.f32 %v2300, %v337
        %v2316 = vmul.f32 %v2295, %v350
        %v2317 = vmul.f32 %v2296, %v350
        %v2318 = vmul.f32 %v2297, %v350
        %v2319 = vmul.f32 %v2298, %v350
        %v2320 = vmul.f32 %v2299, %v350
        %v2321 = vmul.f32 %v2300, %v350
        %v2322 = vmul.f32 %v2301, %v350
        %v2323 = vmul.f32 %v2302, %v350
        %v2324 = vmul.f32 %v2303, %v350
        %v2325 = vadd.f32 %v2307, %v2316
        %v2326 = vadd.f32 %v2308, %v2317
        %v2327 = vadd.f32 %v2309, %v2318
        %v2328 = vadd.f32 %v2310, %v2319
        %v2329 = vadd.f32 %v2311, %v2320
        %v2330 = vadd.f32 %v2312, %v2321
        %v2331 = vadd.f32 %v2313, %v2322
        %v2332 = vadd.f32 %v2314, %v2323
        %v2333 = vadd.f32 %v2315, %v2324
        %v2334 = vmul.f32 %v2298, %v372
        %v2335 = vmul.f32 %v2299, %v372
        %v2336 = vmul.f32 %v2300, %v372
        %v2337 = vmul.f32 %v2301, %v372
        %v2338 = vmul.f32 %v2302, %v372
        %v2339 = vmul.f32 %v2303, %v372
        %v2340 = vmul.f32 %v2304, %v372
        %v2341 = vmul.f32 %v2305, %v372
        %v2342 = vmul.f32 %v2306, %v372
        %v2343 = vadd.f32 %v2325, %v2334
        %v2344 = vadd.f32 %v2326, %v2335
        %v2345 = vadd.f32 %v2327, %v2336
        %v2346 = vadd.f32 %v2328, %v2337
        %v2347 = vadd.f32 %v2329, %v2338
        %v2348 = vadd.f32 %v2330, %v2339
        %v2349 = vadd.f32 %v2331, %v2340
        %v2350 = vadd.f32 %v2332, %v2341
        %v2351 = vadd.f32 %v2333, %v2342
        %v2352 = vmul.f32 %v2292, %v394
        %v2353 = vmul.f32 %v2293, %v394
        %v2354 = vmul.f32 %v2294, %v394
        %v2355 = vmul.f32 %v2295, %v394
        %v2356 = vmul.f32 %v2296, %v394
        %v2357 = vmul.f32 %v2297, %v394
        %v2358 = vmul.f32 %v2298, %v394
        %v2359 = vmul.f32 %v2299, %v394
        %v2360 = vmul.f32 %v2300, %v394
        %v2370 = vrot.slane %v2352, 1
        %v2371 = vrot.slane %v2353, 1
        %v2372 = vsel %vm413, %v2370, %v2371
        %v2373 = vrot.slane %v2354, 1
        %v2374 = vsel %vm413, %v2371, %v2373
        %v2375 = vrot.slane %v2355, 1
        %v2376 = vrot.slane %v2356, 1
        %v2377 = vsel %vm413, %v2375, %v2376
        %v2378 = vrot.slane %v2357, 1
        %v2379 = vsel %vm413, %v2376, %v2378
        %v2380 = vrot.slane %v2358, 1
        %v2381 = vrot.slane %v2359, 1
        %v2382 = vsel %vm413, %v2380, %v2381
        %v2383 = vrot.slane %v2360, 1
        %v2384 = vsel %vm413, %v2381, %v2383
        %v2394 = vadd.f32 %v2343, %v2372
        %v2395 = vadd.f32 %v2344, %v2374
        %v2396 = vadd.f32 %v2345, %v2373
        %v2397 = vadd.f32 %v2346, %v2377
        %v2398 = vadd.f32 %v2347, %v2379
        %v2399 = vadd.f32 %v2348, %v2378
        %v2400 = vadd.f32 %v2349, %v2382
        %v2401 = vadd.f32 %v2350, %v2384
        %v2402 = vadd.f32 %v2351, %v2383
        %v2403 = vmul.f32 %v2295, %v450
        %v2404 = vmul.f32 %v2296, %v450
        %v2405 = vmul.f32 %v2297, %v450
        %v2406 = vmul.f32 %v2298, %v450
        %v2407 = vmul.f32 %v2299, %v450
        %v2408 = vmul.f32 %v2300, %v450
        %v2409 = vmul.f32 %v2301, %v450
        %v2410 = vmul.f32 %v2302, %v450
        %v2411 = vmul.f32 %v2303, %v450
        %v2421 = vrot.slane %v2403, 1
        %v2422 = vrot.slane %v2404, 1
        %v2423 = vsel %vm413, %v2421, %v2422
        %v2424 = vrot.slane %v2405, 1
        %v2425 = vsel %vm413, %v2422, %v2424
        %v2426 = vrot.slane %v2406, 1
        %v2427 = vrot.slane %v2407, 1
        %v2428 = vsel %vm413, %v2426, %v2427
        %v2429 = vrot.slane %v2408, 1
        %v2430 = vsel %vm413, %v2427, %v2429
        %v2431 = vrot.slane %v2409, 1
        %v2432 = vrot.slane %v2410, 1
        %v2433 = vsel %vm413, %v2431, %v2432
        %v2434 = vrot.slane %v2411, 1
        %v2435 = vsel %vm413, %v2432, %v2434
        %v2445 = vadd.f32 %v2394, %v2423
        %v2446 = vadd.f32 %v2395, %v2425
        %v2447 = vadd.f32 %v2396, %v2424
        %v2448 = vadd.f32 %v2397, %v2428
        %v2449 = vadd.f32 %v2398, %v2430
        %v2450 = vadd.f32 %v2399, %v2429
        %v2451 = vadd.f32 %v2400, %v2433
        %v2452 = vadd.f32 %v2401, %v2435
        %v2453 = vadd.f32 %v2402, %v2434
        %v2454 = vmul.f32 %v2298, %v505
        %v2455 = vmul.f32 %v2299, %v505
        %v2456 = vmul.f32 %v2300, %v505
        %v2457 = vmul.f32 %v2301, %v505
        %v2458 = vmul.f32 %v2302, %v505
        %v2459 = vmul.f32 %v2303, %v505
        %v2460 = vmul.f32 %v2304, %v505
        %v2461 = vmul.f32 %v2305, %v505
        %v2462 = vmul.f32 %v2306, %v505
        %v2472 = vrot.slane %v2454, 1
        %v2473 = vrot.slane %v2455, 1
        %v2474 = vsel %vm413, %v2472, %v2473
        %v2475 = vrot.slane %v2456, 1
        %v2476 = vsel %vm413, %v2473, %v2475
        %v2477 = vrot.slane %v2457, 1
        %v2478 = vrot.slane %v2458, 1
        %v2479 = vsel %vm413, %v2477, %v2478
        %v2480 = vrot.slane %v2459, 1
        %v2481 = vsel %vm413, %v2478, %v2480
        %v2482 = vrot.slane %v2460, 1
        %v2483 = vrot.slane %v2461, 1
        %v2484 = vsel %vm413, %v2482, %v2483
        %v2485 = vrot.slane %v2462, 1
        %v2486 = vsel %vm413, %v2483, %v2485
        %v2496 = vadd.f32 %v2445, %v2474
        %v2497 = vadd.f32 %v2446, %v2476
        %v2498 = vadd.f32 %v2447, %v2475
        %v2499 = vadd.f32 %v2448, %v2479
        %v2500 = vadd.f32 %v2449, %v2481
        %v2501 = vadd.f32 %v2450, %v2480
        %v2502 = vadd.f32 %v2451, %v2484
        %v2503 = vadd.f32 %v2452, %v2486
        %v2504 = vadd.f32 %v2453, %v2485
        %v2505 = vmul.f32 %v2292, %v560
        %v2506 = vmul.f32 %v2293, %v560
        %v2507 = vmul.f32 %v2294, %v560
        %v2508 = vmul.f32 %v2295, %v560
        %v2509 = vmul.f32 %v2296, %v560
        %v2510 = vmul.f32 %v2297, %v560
        %v2511 = vmul.f32 %v2298, %v560
        %v2512 = vmul.f32 %v2299, %v560
        %v2513 = vmul.f32 %v2300, %v560
        %v2523 = vrot.slane %v2505, 2
        %v2524 = vrot.slane %v2506, 2
        %v2525 = vsel %vm579, %v2523, %v2524
        %v2526 = vrot.slane %v2507, 2
        %v2527 = vsel %vm579, %v2524, %v2526
        %v2528 = vrot.slane %v2508, 2
        %v2529 = vrot.slane %v2509, 2
        %v2530 = vsel %vm579, %v2528, %v2529
        %v2531 = vrot.slane %v2510, 2
        %v2532 = vsel %vm579, %v2529, %v2531
        %v2533 = vrot.slane %v2511, 2
        %v2534 = vrot.slane %v2512, 2
        %v2535 = vsel %vm579, %v2533, %v2534
        %v2536 = vrot.slane %v2513, 2
        %v2537 = vsel %vm579, %v2534, %v2536
        %v2547 = vadd.f32 %v2496, %v2525
        %v2548 = vadd.f32 %v2497, %v2527
        %v2549 = vadd.f32 %v2498, %v2526
        %v2550 = vadd.f32 %v2499, %v2530
        %v2551 = vadd.f32 %v2500, %v2532
        %v2552 = vadd.f32 %v2501, %v2531
        %v2553 = vadd.f32 %v2502, %v2535
        %v2554 = vadd.f32 %v2503, %v2537
        %v2555 = vadd.f32 %v2504, %v2536
        %v2556 = vmul.f32 %v2295, %v616
        %v2557 = vmul.f32 %v2296, %v616
        %v2558 = vmul.f32 %v2297, %v616
        %v2559 = vmul.f32 %v2298, %v616
        %v2560 = vmul.f32 %v2299, %v616
        %v2561 = vmul.f32 %v2300, %v616
        %v2562 = vmul.f32 %v2301, %v616
        %v2563 = vmul.f32 %v2302, %v616
        %v2564 = vmul.f32 %v2303, %v616
        %v2574 = vrot.slane %v2556, 2
        %v2575 = vrot.slane %v2557, 2
        %v2576 = vsel %vm579, %v2574, %v2575
        %v2577 = vrot.slane %v2558, 2
        %v2578 = vsel %vm579, %v2575, %v2577
        %v2579 = vrot.slane %v2559, 2
        %v2580 = vrot.slane %v2560, 2
        %v2581 = vsel %vm579, %v2579, %v2580
        %v2582 = vrot.slane %v2561, 2
        %v2583 = vsel %vm579, %v2580, %v2582
        %v2584 = vrot.slane %v2562, 2
        %v2585 = vrot.slane %v2563, 2
        %v2586 = vsel %vm579, %v2584, %v2585
        %v2587 = vrot.slane %v2564, 2
        %v2588 = vsel %vm579, %v2585, %v2587
        %v2598 = vadd.f32 %v2547, %v2576
        %v2599 = vadd.f32 %v2548, %v2578
        %v2600 = vadd.f32 %v2549, %v2577
        %v2601 = vadd.f32 %v2550, %v2581
        %v2602 = vadd.f32 %v2551, %v2583
        %v2603 = vadd.f32 %v2552, %v2582
        %v2604 = vadd.f32 %v2553, %v2586
        %v2605 = vadd.f32 %v2554, %v2588
        %v2606 = vadd.f32 %v2555, %v2587
        %v2607 = vmul.f32 %v2298, %v671
        %v2608 = vmul.f32 %v2299, %v671
        %v2609 = vmul.f32 %v2300, %v671
        %v2610 = vmul.f32 %v2301, %v671
        %v2611 = vmul.f32 %v2302, %v671
        %v2612 = vmul.f32 %v2303, %v671
        %v2613 = vmul.f32 %v2304, %v671
        %v2614 = vmul.f32 %v2305, %v671
        %v2615 = vmul.f32 %v2306, %v671
        %v2625 = vrot.slane %v2607, 2
        %v2626 = vrot.slane %v2608, 2
        %v2627 = vsel %vm579, %v2625, %v2626
        %v2628 = vrot.slane %v2609, 2
        %v2629 = vsel %vm579, %v2626, %v2628
        %v2630 = vrot.slane %v2610, 2
        %v2631 = vrot.slane %v2611, 2
        %v2632 = vsel %vm579, %v2630, %v2631
        %v2633 = vrot.slane %v2612, 2
        %v2634 = vsel %vm579, %v2631, %v2633
        %v2635 = vrot.slane %v2613, 2
        %v2636 = vrot.slane %v2614, 2
        %v2637 = vsel %vm579, %v2635, %v2636
        %v2638 = vrot.slane %v2615, 2
        %v2639 = vsel %vm579, %v2636, %v2638
        %v2649 = vadd.f32 %v2598, %v2627
        %v2650 = vadd.f32 %v2599, %v2629
        %v2651 = vadd.f32 %v2600, %v2628
        %v2652 = vadd.f32 %v2601, %v2632
        %v2653 = vadd.f32 %v2602, %v2634
        %v2654 = vadd.f32 %v2603, %v2633
        %v2655 = vadd.f32 %v2604, %v2637
        %v2656 = vadd.f32 %v2605, %v2639
        %v2657 = vadd.f32 %v2606, %v2638
        %v2658 = vadd.f32 %v2649, %v727
        %v2659 = vadd.f32 %v2650, %v727
        %v2660 = vadd.f32 %v2651, %v727
        %v2661 = vadd.f32 %v2652, %v727
        %v2662 = vadd.f32 %v2653, %v727
        %v2663 = vadd.f32 %v2654, %v727
        %v2664 = vadd.f32 %v2655, %v727
        %v2665 = vadd.f32 %v2656, %v727
        %v2666 = vadd.f32 %v2657, %v727
        %s2667 = scalar_lea.vmem %s205, 360
        %2668 = vst [vmem:[%s2667] sm:$0xff] %v2658
        %2669 = vst [vmem:[%s2667 + $0x8] sm:$0xff] %v2659
        %2670 = vst [vmem:[%s2667 + $0x10] sm:$0x3] %v2660
        %2671 = vst [vmem:[%s2667 + $0x18] sm:$0xff] %v2661
        %2672 = vst [vmem:[%s2667 + $0x20] sm:$0xff] %v2662
        %2673 = vst [vmem:[%s2667 + $0x28] sm:$0x3] %v2663
        %2674 = vst [vmem:[%s2667 + $0x30] sm:$0xff] %v2664
        %2675 = vst [vmem:[%s2667 + $0x38] sm:$0xff] %v2665
        %2676 = vst [vmem:[%s2667 + $0x40] sm:$0x3] %v2666
        %p2677 = scmp.lt.s32.totalorder %s18, 1
        %s2678 = scalar_select %p2677, %s18, 1
        %s2679 = smul.addr %s2678, 54
        %s2680 = smul.addr %s2679, 8
        %s2681 = scalar_lea.vmem %s3, %s2680
        // Predicated region
        $region41: #{tpu_custom_call.1} parent=31 // pred_check
          %p2682 = pneg %p104
        $region42: #{tpu_custom_call.1} parent=31 // pred_check_branch
          %2684 = sbr.rel (%p2682) target = $region44
        $region43: #{tpu_custom_call.1} parent=31 // pred_region
          _
        $region44: #{tpu_custom_call.1} parent=31 // pred_fallthru
          _
      $region32: #{tpu_custom_call.1} parent=5 // pred_fallthru
        _
      %p2685 = scmp.le.s32.totalorder 2, %s13
      // Predicated region
      $region45: #{tpu_custom_call.1} parent=5 // pred_check
        %p2686 = pneg %p2685
      $region46: #{tpu_custom_call.1} parent=5 // pred_check_branch
        %2688 = sbr.rel (%p2686) target = $region48
      $region47: #{tpu_custom_call.1} parent=5 // pred_region
        %s2689 = ssub.s32 %s13, 2
        // Predicated region
        $region49: #{tpu_custom_call.1} parent=47 // pred_check
          %p2690 = pneg %p110
        $region50: #{tpu_custom_call.1} parent=47 // pred_check_branch
          %2692 = sbr.rel (%p2690) target = $region52
        $region51: #{tpu_custom_call.1} parent=47 // pred_region
          %p2693 = scmp.lt.s32.totalorder %s19, 1
          %s2694 = scalar_select %p2693, %s19, 1
          %s2695 = smul.addr %s2694, 54
          %s2696 = smul.addr %s2695, 8
          %s2697 = scalar_lea.vmem %s3, %s2696
        $region52: #{tpu_custom_call.1} parent=47 // pred_fallthru
          _
      $region48: #{tpu_custom_call.1} parent=5 // pred_fallthru
        _
    $region6: #{tpu_custom_call.1} parent=1 // loop_footer
      %s17 = sadd.s32 1, %s13
    $region7: #{tpu_custom_call.1} parent=1 // loop_footer_branch
      %12 = sbr.rel target = $region3
    $region8: #{tpu_custom_call.1} parent=1 // loop_exit
      _
    %2698 = vsyncpa [#allocation4], 1
    %s2699 = scalar_lea.sflag [#allocation4], 1
    %2700 = vsyncpa %s2699, 1
    %2701 = vsyncpa [#allocation6], 1

</llo_original>
